<compile_context>
chip_gen: v5e
topology: v5e:2x2
jax: 0.10.0
libtpu: 0.0.40
codegen_flags: <defaults>
</compile_context>

<pallas_src>
import functools

import jax
import jax.numpy as jnp
from jax.experimental import pallas as pl
from jax.experimental.pallas import tpu as pltpu

NEG_SLOPE = 0.01                     # torch.nn.functional.leaky_relu default
LANE = 128
_SCOPED_VMEM_DEFAULT = 32 * 1024 * 1024   # v6e/v7x scoped default (never go below)


def _leaky_relu(x):
    return jnp.where(x > 0, x, NEG_SLOPE * x)


def _round_up(n, m):
    return -(-n // m) * m


def _pad2d(x, rows, cols):
    return jnp.pad(x, ((0, rows - x.shape[0]), (0, cols - x.shape[1])))


def _physical_vmem_bytes():
    try:
        info = pltpu.get_tpu_info()
        for attr in ("vmem_capacity_bytes", "vmem_size_bytes"):
            v = getattr(info, attr, None)
            if isinstance(v, int) and v > 0:
                return v
    except Exception:
        pass
    return 64 * 1024 * 1024          # conservative: v7x per-TC VMEM


def _num_tensorcores():
    # v7x has 2 TensorCores per chip (as do v4/v5p megacore); v5e/v6e have 1.
    try:
        kind = getattr(jax.devices()[0], "device_kind", "").lower()
        if any(tag in kind for tag in ("v7", "v4", "v5p")):
            return 2
    except Exception:
        pass
    return 1


def _pick_block_b(B, n_tc):
    """Chip-aware batch-tile size.  Always returns a divisor of B."""
    if n_tc > 1 and B >= 256:
        # Ensure grid >= n_tc so dimension_semantics=("parallel",) shards across TCs.
        start = (B // n_tc) // 16 * 16
        for cand in range(start, 15, -16):
            if B % cand == 0:
                return cand
    # Single-TC chips (v5e/v6e) or small batch: biggest tile that divides B,
    # capped so the activation buffers stay comfortably inside VMEM.
    if B > 2048:
        for cand in (2048, 1024, 512, 256, 128):
            if B % cand == 0:
                return cand
    return B


def actor_kernel(f_ref, a_ref, w1f_ref, w1a_ref, w2_ref, w3_ref,
                 bias_h_ref, head_ref, out_ref, *, a_dim):
    """One batch-tile of the actor MLP + distribution-parameter head."""
    f = f_ref[...]                                   # (bm, d_f_pad)  bf16
    a = a_ref[...]                                   # (bm, d_a_pad)  bf16
    b1 = bias_h_ref[0:1, :]                          # (1, h_pad) f32
    b2 = bias_h_ref[1:2, :]
    b3 = head_ref[0:1, :]                            # (1, out_cols) f32
    low = head_ref[1:2, :]
    span = head_ref[2:3, :]

    # Fused concat:  [f, a] @ W1  ==  f @ W1f + a @ W1a
    h1 = (jnp.dot(f, w1f_ref[...], preferred_element_type=jnp.float32)
          + jnp.dot(a, w1a_ref[...], preferred_element_type=jnp.float32)
          + b1)
    h1 = _leaky_relu(h1)

    h2 = (jnp.dot(h1.astype(w2_ref.dtype), w2_ref[...],
                  preferred_element_type=jnp.float32) + b2)
    h2 = _leaky_relu(h2)

    # Single merged head dot (f32 weights); packed columns:
    #   [ loc (a_dim) | raw_scale (a_dim) | loc-dup (a_dim) | zero pad ]
    o = jnp.dot(h2, w3_ref[...], preferred_element_type=jnp.float32) + b3

    lane = jax.lax.broadcasted_iota(jnp.int32, o.shape, dimension=1)
    scale = jax.nn.softplus(o) + 1e-5                # EUP
    action = low + span * jax.nn.sigmoid(o)          # Sigmoid + Affine transforms
    out_ref[...] = jnp.where(lane < a_dim, o,
                             jnp.where(lane < 2 * a_dim, scale, action))


def actor_network_forward(features, actions, params, action_low, action_high,
                          *, block_b=None, compute_dtype=jnp.bfloat16):
    """Returns (loc, scale_diag, transformed_loc_action), each (B, a_dim) f32."""
    f_flat = features.reshape(features.shape[:-2] + (-1,))
    a_flat = actions.reshape(actions.shape[:-2] + (-1,))
    B, d_f = f_flat.shape
    _, d_a = a_flat.shape

    w1, b1, w2, b2, w3, b3 = params
    hidden = w1.shape[1]
    a_dim = action_low.shape[-1]
    assert w1.shape == (d_f + d_a, hidden)
    assert w3.shape == (hidden, 2 * a_dim)

    h_pad = _round_up(hidden, LANE)
    d_f_pad = _round_up(d_f, LANE)
    d_a_pad = _round_up(d_a, LANE)
    out_cols = _round_up(3 * a_dim, LANE)    # packed [loc|scale|action] slab

    # ---- operand prep: lane/K padding, concat-fusion split, packed head ----
    w1f = _pad2d(w1[:d_f].astype(compute_dtype), d_f_pad, h_pad)
    w1a = _pad2d(w1[d_f:].astype(compute_dtype), d_a_pad, h_pad)
    w2p = _pad2d(w2.astype(compute_dtype), h_pad, h_pad)

    w3f = w3.astype(jnp.float32)             # head stays f32 (tiny, precise loc)
    w3_loc, w3_raw = w3f[:, :a_dim], w3f[:, a_dim:]
    w3p = _pad2d(jnp.concatenate([w3_loc, w3_raw, w3_loc], axis=1), h_pad, out_cols)

    b1p = jnp.pad(b1.astype(jnp.float32), (0, h_pad - hidden)).reshape(1, h_pad)
    b2p = jnp.pad(b2.astype(jnp.float32), (0, h_pad - hidden)).reshape(1, h_pad)
    bias_h = jnp.concatenate([b1p, b2p], axis=0)                 # (2, h_pad)

    b3f = b3.astype(jnp.float32)
    b3_packed = jnp.concatenate([b3f[:a_dim], b3f[a_dim:], b3f[:a_dim]])
    b3_packed = jnp.pad(b3_packed, (0, out_cols - 3 * a_dim)).reshape(1, out_cols)
    zeros2a = jnp.zeros((2 * a_dim,), jnp.float32)
    low_vec = jnp.concatenate([zeros2a, action_low.astype(jnp.float32)])
    low_vec = jnp.pad(low_vec, (0, out_cols - 3 * a_dim)).reshape(1, out_cols)
    span_vec = jnp.concatenate(
        [zeros2a, (action_high - action_low).astype(jnp.float32)])
    span_vec = jnp.pad(span_vec, (0, out_cols - 3 * a_dim)).reshape(1, out_cols)
    head_consts = jnp.concatenate([b3_packed, low_vec, span_vec], axis=0)  # (3, out_cols)

    f_in = jnp.pad(f_flat.astype(compute_dtype), ((0, 0), (0, d_f_pad - d_f)))
    a_in = jnp.pad(a_flat.astype(compute_dtype), ((0, 0), (0, d_a_pad - d_a)))

    # ---- chip-aware batch tiling ----
    n_tc = _num_tensorcores()
    if block_b is None:
        block_b = _pick_block_b(B, n_tc)
    assert B % block_b == 0
    assert block_b == B or block_b % 16 == 0
    grid = (B // block_b,)

    # ---- scheduler hint ----
    flops = 2 * B * (d_f_pad * h_pad + d_a_pad * h_pad
                     + h_pad * h_pad + h_pad * out_cols)
    bytes_accessed = (
        int(f_in.size) * f_in.dtype.itemsize + int(a_in.size) * a_in.dtype.itemsize
        + sum(int(t.size) * t.dtype.itemsize
              for t in (w1f, w1a, w2p, w3p, bias_h, head_consts))
        + B * out_cols * 4)
    cost = pl.CostEstimate(flops=flops, transcendentals=4 * B * out_cols,
                           bytes_accessed=bytes_accessed)

    # ---- VMEM budget: batch-varying operands double-buffered, weights 1x ----
    def _blk_bytes(shape, dtype):
        return (_round_up(shape[0], 8) * _round_up(shape[-1], LANE)
                * jnp.dtype(dtype).itemsize)

    vmem_est = (
        2 * (_blk_bytes((block_b, d_f_pad), compute_dtype)
             + _blk_bytes((block_b, d_a_pad), compute_dtype)
             + _blk_bytes((block_b, out_cols), jnp.float32))
        + _blk_bytes(w1f.shape, compute_dtype)
        + _blk_bytes(w1a.shape, compute_dtype)
        + _blk_bytes(w2p.shape, compute_dtype)
        + _blk_bytes(w3p.shape, jnp.float32)
        + _blk_bytes(bias_h.shape, jnp.float32)
        + _blk_bytes(head_consts.shape, jnp.float32)
        + 3 * _blk_bytes((block_b, h_pad), jnp.float32))      # h1/h2/o temporaries

    compiler_kwargs = dict(dimension_semantics=("parallel",))
    vmem_cap = max(_physical_vmem_bytes() - 8 * 1024 * 1024, _SCOPED_VMEM_DEFAULT)
    if vmem_est > _SCOPED_VMEM_DEFAULT:
        # Never lower below the generation default; never exceed physical VMEM.
        # (For hidden sizes whose weights alone blow past vmem_cap, a K-tiled
        #  reduction grid axis over `hidden` would be needed — not required at
        #  these model sizes.)
        compiler_kwargs["vmem_limit_bytes"] = int(min(vmem_est, vmem_cap))

    kernel_fn = functools.partial(actor_kernel, a_dim=a_dim)

    def _call(single_buffer_weights):
        def full(arr):
            shp = arr.shape
            idx = lambda i: (0,) * len(shp)
            if single_buffer_weights:
                # Grid-invariant weights: no point double-buffering them.
                return pl.BlockSpec(shp, idx, pipeline_mode=pl.Buffered(1))
            return pl.BlockSpec(shp, idx)

        def batched(cols):
            return pl.BlockSpec((block_b, cols), lambda i: (i, 0))

        return pl.pallas_call(
            kernel_fn,
            out_shape=jax.ShapeDtypeStruct((B, out_cols), jnp.float32),
            grid=grid,
            in_specs=[
                batched(d_f_pad), batched(d_a_pad),
                full(w1f), full(w1a), full(w2p), full(w3p),
                full(bias_h), full(head_consts),
            ],
            out_specs=batched(out_cols),
            compiler_params=pltpu.CompilerParams(**compiler_kwargs),
            cost_estimate=cost,
        )(f_in, a_in, w1f, w1a, w2p, w3p, bias_h, head_consts)

    try:
        out = _call(True)
    except Exception:
        # Installed jax may not support pipeline_mode=pl.Buffered; retry without.
        out = _call(False)

    loc = out[:, :a_dim]
    scale = out[:, a_dim:2 * a_dim]
    action = out[:, 2 * a_dim:3 * a_dim]
    # TODO(synk): a full TransformedDistribution (sampling / log_prob with the
    # change-of-variables log-det) has no Pallas equivalent; we return the
    # base-dist parameters (loc, scale_diag) plus the deterministically
    # transformed loc (low + (high-low)*sigmoid(loc)).
    return loc, scale, action


def init_params(key, d_in, hidden, a_dim):
    ks = jax.random.split(key, 6)

    def lin(kw, kb, fan_in, fan_out):
        bound = 1.0 / jnp.sqrt(fan_in)
        w = jax.random.uniform(kw, (fan_in, fan_out), jnp.float32, -bound, bound)
        b = jax.random.uniform(kb, (fan_out,), jnp.float32, -bound, bound)
        return w, b

    w1, b1 = lin(ks[0], ks[1], d_in, hidden)
    w2, b2 = lin(ks[2], ks[3], hidden, hidden)
    w3, b3 = lin(ks[4], ks[5], hidden, 2 * a_dim)
    return (w1, b1, w2, b2, w3, b3)


if __name__ == "__main__":
    # Small, module-consistent shapes.
    batch = 8
    observation_size = 16
    action_dim = 4
    sequence_length = 8
    base_depth = 32

    # d_in == seq*(action_dim + obs) + obs
    d_in = sequence_length * (action_dim + observation_size) + observation_size

    key = jax.random.PRNGKey(0)
    k_feat, k_act, k_par = jax.random.split(key, 3)

    features = jax.random.normal(
        k_feat, (batch, sequence_length + 1, observation_size), jnp.float32)
    actions = jax.random.normal(
        k_act, (batch, sequence_length, action_dim), jnp.float32)

    params = init_params(k_par, d_in, base_depth, action_dim)

    action_low = -jnp.ones((action_dim,), jnp.float32)
    action_high = jnp.ones((action_dim,), jnp.float32)

    loc, scale, action = actor_network_forward(
        features, actions, params, action_low, action_high)
    jax.block_until_ready((loc, scale, action))

    # Plain-JAX f32 reference (kernel matmuls 1-2 are bf16; head is f32).
    x = jnp.concatenate(
        [features.reshape(batch, -1), actions.reshape(batch, -1)], axis=-1)
    w1, b1, w2, b2, w3, b3 = params
    h1 = _leaky_relu(x @ w1 + b1)
    h2 = _leaky_relu(h1 @ w2 + b2)
    o = h2 @ w3 + b3
    ref_loc = o[:, :action_dim]
    ref_scale = jax.nn.softplus(o[:, action_dim:]) + 1e-5
    ref_action = action_low + (action_high - action_low) * jax.nn.sigmoid(ref_loc)

    assert loc.shape == (batch, action_dim)
    assert scale.shape == (batch, action_dim)
    assert action.shape == (batch, action_dim)
    assert float(jnp.max(jnp.abs(loc - ref_loc))) < 5e-2
    assert float(jnp.max(jnp.abs(scale - ref_scale))) < 5e-2
    assert float(jnp.max(jnp.abs(action - ref_action))) < 5e-2
    assert bool(jnp.all(scale > 0))
    assert bool(jnp.all(action >= action_low[None, :] - 1e-6))
    assert bool(jnp.all(action <= action_high[None, :] + 1e-6))

    print("KERNEL_OK")
</pallas_src>

<mosaic_0001>
module attributes {stable_mosaic.version = 11 : i64} {
  func.func @actor_kernel(%arg0: i32, %arg1: memref<8x256xbf16, #tpu.memory_space<vmem>>, %arg2: memref<8x128xbf16, #tpu.memory_space<vmem>>, %arg3: memref<256x128xbf16, #tpu.memory_space<vmem>>, %arg4: memref<128x128xbf16, #tpu.memory_space<vmem>>, %arg5: memref<128x128xbf16, #tpu.memory_space<vmem>>, %arg6: memref<128x128xf32, #tpu.memory_space<vmem>>, %arg7: memref<2x128xf32, #tpu.memory_space<vmem>>, %arg8: memref<3x128xf32, #tpu.memory_space<vmem>>, %arg9: memref<8x128xf32, #tpu.memory_space<vmem>>) attributes {dimension_semantics = [#tpu.dimension_semantics<parallel>], iteration_bounds = array<i64: 1>, scalar_prefetch = 0 : i64, scratch_operands = 0 : i64, tpu.core_type = #tpu.core_type<tc>, window_params = [{transform_indices = @transform_0, window_bounds = array<i64: 8, 256>}, {transform_indices = @transform_1, window_bounds = array<i64: 8, 128>}, {pipeline_mode = #tpu.pipeline_mode<synchronous>, transform_indices = @transform_2, window_bounds = array<i64: 256, 128>}, {pipeline_mode = #tpu.pipeline_mode<synchronous>, transform_indices = @transform_3, window_bounds = array<i64: 128, 128>}, {pipeline_mode = #tpu.pipeline_mode<synchronous>, transform_indices = @transform_4, window_bounds = array<i64: 128, 128>}, {pipeline_mode = #tpu.pipeline_mode<synchronous>, transform_indices = @transform_5, window_bounds = array<i64: 128, 128>}, {pipeline_mode = #tpu.pipeline_mode<synchronous>, transform_indices = @transform_6, window_bounds = array<i64: 2, 128>}, {pipeline_mode = #tpu.pipeline_mode<synchronous>, transform_indices = @transform_7, window_bounds = array<i64: 3, 128>}, {transform_indices = @transform_8, window_bounds = array<i64: 8, 128>}]} {
    %c0 = arith.constant 0 : index
    %c0_0 = arith.constant 0 : index
    %0 = vector.load %arg1[%c0, %c0_0] : memref<8x256xbf16, #tpu.memory_space<vmem>>, vector<8x256xbf16>
    %c0_1 = arith.constant 0 : index
    %c0_2 = arith.constant 0 : index
    %1 = vector.load %arg2[%c0_1, %c0_2] : memref<8x128xbf16, #tpu.memory_space<vmem>>, vector<8x128xbf16>
    %c0_3 = arith.constant 0 : index
    %c0_4 = arith.constant 0 : index
    %2 = vector.load %arg7[%c0_3, %c0_4] : memref<2x128xf32, #tpu.memory_space<vmem>>, vector<1x128xf32>
    %c1 = arith.constant 1 : index
    %c0_5 = arith.constant 0 : index
    %3 = vector.load %arg7[%c1, %c0_5] : memref<2x128xf32, #tpu.memory_space<vmem>>, vector<1x128xf32>
    %c0_6 = arith.constant 0 : index
    %c0_7 = arith.constant 0 : index
    %4 = vector.load %arg8[%c0_6, %c0_7] : memref<3x128xf32, #tpu.memory_space<vmem>>, vector<1x128xf32>
    %c1_8 = arith.constant 1 : index
    %c0_9 = arith.constant 0 : index
    %5 = vector.load %arg8[%c1_8, %c0_9] : memref<3x128xf32, #tpu.memory_space<vmem>>, vector<1x128xf32>
    %c2 = arith.constant 2 : index
    %c0_10 = arith.constant 0 : index
    %6 = vector.load %arg8[%c2, %c0_10] : memref<3x128xf32, #tpu.memory_space<vmem>>, vector<1x128xf32>
    %c0_11 = arith.constant 0 : index
    %c0_12 = arith.constant 0 : index
    %7 = vector.load %arg3[%c0_11, %c0_12] : memref<256x128xbf16, #tpu.memory_space<vmem>>, vector<256x128xbf16>
    %cst = arith.constant dense<0.000000e+00> : vector<8x128xf32>
    %8 = tpu.matmul %0, %7, %cst {dimension_numbers = #tpu.dot_dimension_numbers<[1], [0], [0], [1], [0, 0, 1, 1], [], []>} : vector<8x256xbf16>, vector<256x128xbf16>, vector<8x128xf32> -> vector<8x128xf32>
    %c0_13 = arith.constant 0 : index
    %c0_14 = arith.constant 0 : index
    %9 = vector.load %arg4[%c0_13, %c0_14] : memref<128x128xbf16, #tpu.memory_space<vmem>>, vector<128x128xbf16>
    %cst_15 = arith.constant dense<0.000000e+00> : vector<8x128xf32>
    %10 = tpu.matmul %1, %9, %cst_15 {dimension_numbers = #tpu.dot_dimension_numbers<[1], [0], [0], [1], [0, 0, 1, 1], [], []>} : vector<8x128xbf16>, vector<128x128xbf16>, vector<8x128xf32> -> vector<8x128xf32>
    %11 = arith.addf %8, %10 : vector<8x128xf32>
    %12 = vector.broadcast %2 : vector<1x128xf32> to vector<8x128xf32>
    %13 = arith.addf %11, %12 : vector<8x128xf32>
    %cst_16 = arith.constant 0.000000e+00 : f32
    %14 = vector.broadcast %cst_16 : f32 to vector<8x128xf32>
    %15 = arith.cmpf ogt, %13, %14 : vector<8x128xf32>
    %cst_17 = arith.constant 0.00999999977 : f32
    %16 = vector.broadcast %cst_17 : f32 to vector<8x128xf32>
    %17 = arith.mulf %16, %13 : vector<8x128xf32>
    %18 = arith.select %15, %13, %17 : vector<8x128xi1>, vector<8x128xf32>
    %19 = arith.truncf %18 : vector<8x128xf32> to vector<8x128xbf16>
    %c0_18 = arith.constant 0 : index
    %c0_19 = arith.constant 0 : index
    %20 = vector.load %arg5[%c0_18, %c0_19] : memref<128x128xbf16, #tpu.memory_space<vmem>>, vector<128x128xbf16>
    %cst_20 = arith.constant dense<0.000000e+00> : vector<8x128xf32>
    %21 = tpu.matmul %19, %20, %cst_20 {dimension_numbers = #tpu.dot_dimension_numbers<[1], [0], [0], [1], [0, 0, 1, 1], [], []>} : vector<8x128xbf16>, vector<128x128xbf16>, vector<8x128xf32> -> vector<8x128xf32>
    %22 = vector.broadcast %3 : vector<1x128xf32> to vector<8x128xf32>
    %23 = arith.addf %21, %22 : vector<8x128xf32>
    %cst_21 = arith.constant 0.000000e+00 : f32
    %24 = vector.broadcast %cst_21 : f32 to vector<8x128xf32>
    %25 = arith.cmpf ogt, %23, %24 : vector<8x128xf32>
    %cst_22 = arith.constant 0.00999999977 : f32
    %26 = vector.broadcast %cst_22 : f32 to vector<8x128xf32>
    %27 = arith.mulf %26, %23 : vector<8x128xf32>
    %28 = arith.select %25, %23, %27 : vector<8x128xi1>, vector<8x128xf32>
    %c0_23 = arith.constant 0 : index
    %c0_24 = arith.constant 0 : index
    %29 = vector.load %arg6[%c0_23, %c0_24] : memref<128x128xf32, #tpu.memory_space<vmem>>, vector<128x128xf32>
    %cst_25 = arith.constant dense<0.000000e+00> : vector<8x128xf32>
    %30 = tpu.matmul %28, %29, %cst_25 {dimension_numbers = #tpu.dot_dimension_numbers<[1], [0], [0], [1], [0, 0, 1, 1], [], []>} : vector<8x128xf32>, vector<128x128xf32>, vector<8x128xf32> -> vector<8x128xf32>
    %31 = vector.broadcast %4 : vector<1x128xf32> to vector<8x128xf32>
    %32 = arith.addf %30, %31 : vector<8x128xf32>
    %33 = tpu.iota {dimensions = array<i32: 1>} : vector<8x128xi32>
    %cst_26 = arith.constant 0.000000e+00 : f32
    %34 = vector.broadcast %cst_26 : f32 to vector<8x128xf32>
    %35 = arith.maximumf %32, %34 : vector<8x128xf32>
    %36 = vector.broadcast %cst_26 : f32 to vector<8x128xf32>
    %37 = arith.subf %32, %36 : vector<8x128xf32>
    %38 = arith.cmpf one, %37, %37 : vector<8x128xf32>
    %39 = vector.broadcast %cst_26 : f32 to vector<8x128xf32>
    %40 = arith.addf %32, %39 : vector<8x128xf32>
    %41 = math.absf %37 : vector<8x128xf32>
    %cst_27 = arith.constant 0.000000e+00 : f32
    %42 = vector.broadcast %cst_27 : f32 to vector<8x128xf32>
    %43 = arith.subf %42, %41 : vector<8x128xf32>
    %44 = math.exp %43 : vector<8x128xf32>
    %45 = math.log1p %44 : vector<8x128xf32>
    %46 = arith.addf %35, %45 : vector<8x128xf32>
    %47 = arith.select %38, %40, %46 : vector<8x128xi1>, vector<8x128xf32>
    %cst_28 = arith.constant 9.99999974E-6 : f32
    %48 = vector.broadcast %cst_28 : f32 to vector<8x128xf32>
    %49 = arith.addf %47, %48 : vector<8x128xf32>
    %50 = arith.negf %32 : vector<8x128xf32>
    %51 = math.exp %50 : vector<8x128xf32>
    %cst_29 = arith.constant 1.000000e+00 : f32
    %52 = vector.broadcast %cst_29 : f32 to vector<8x128xf32>
    %53 = arith.addf %52, %51 : vector<8x128xf32>
    %54 = arith.divf %52, %53 : vector<8x128xf32>
    %55 = vector.broadcast %6 : vector<1x128xf32> to vector<8x128xf32>
    %56 = arith.mulf %55, %54 : vector<8x128xf32>
    %57 = vector.broadcast %5 : vector<1x128xf32> to vector<8x128xf32>
    %58 = arith.addf %57, %56 : vector<8x128xf32>
    %c4_i32 = arith.constant 4 : i32
    %59 = vector.broadcast %c4_i32 : i32 to vector<8x128xi32>
    %60 = arith.cmpi slt, %33, %59 : vector<8x128xi32>
    %c8_i32 = arith.constant 8 : i32
    %61 = vector.broadcast %c8_i32 : i32 to vector<8x128xi32>
    %62 = arith.cmpi slt, %33, %61 : vector<8x128xi32>
    %63 = arith.select %62, %49, %58 : vector<8x128xi1>, vector<8x128xf32>
    %64 = arith.select %60, %32, %63 : vector<8x128xi1>, vector<8x128xf32>
    %c0_30 = arith.constant 0 : index
    %c0_31 = arith.constant 0 : index
    %65 = vector.load %arg9[%c0_30, %c0_31] : memref<8x128xf32, #tpu.memory_space<vmem>>, vector<8x128xf32>
    tpu.vector_store %arg9[%c0_30, %c0_31], %64 {strides = array<i32>} : memref<8x128xf32, #tpu.memory_space<vmem>>, vector<8x128xf32>,
    return
  }
  func.func @transform_0(%arg0: i32) -> (i32, i32) {
    %c0_i32 = arith.constant 0 : i32
    %c0_i32_0 = arith.constant 0 : i32
    return %arg0, %c0_i32 : i32, i32
  }
  func.func @transform_1(%arg0: i32) -> (i32, i32) {
    %c0_i32 = arith.constant 0 : i32
    %c0_i32_0 = arith.constant 0 : i32
    return %arg0, %c0_i32 : i32, i32
  }
  func.func @transform_2(%arg0: i32) -> (i32, i32) {
    %c0_i32 = arith.constant 0 : i32
    %c0_i32_0 = arith.constant 0 : i32
    %c0_i32_1 = arith.constant 0 : i32
    return %c0_i32, %c0_i32_0 : i32, i32
  }
  func.func @transform_3(%arg0: i32) -> (i32, i32) {
    %c0_i32 = arith.constant 0 : i32
    %c0_i32_0 = arith.constant 0 : i32
    %c0_i32_1 = arith.constant 0 : i32
    return %c0_i32, %c0_i32_0 : i32, i32
  }
  func.func @transform_4(%arg0: i32) -> (i32, i32) {
    %c0_i32 = arith.constant 0 : i32
    %c0_i32_0 = arith.constant 0 : i32
    %c0_i32_1 = arith.constant 0 : i32
    return %c0_i32, %c0_i32_0 : i32, i32
  }
  func.func @transform_5(%arg0: i32) -> (i32, i32) {
    %c0_i32 = arith.constant 0 : i32
    %c0_i32_0 = arith.constant 0 : i32
    %c0_i32_1 = arith.constant 0 : i32
    return %c0_i32, %c0_i32_0 : i32, i32
  }
  func.func @transform_6(%arg0: i32) -> (i32, i32) {
    %c0_i32 = arith.constant 0 : i32
    %c0_i32_0 = arith.constant 0 : i32
    %c0_i32_1 = arith.constant 0 : i32
    return %c0_i32, %c0_i32_0 : i32, i32
  }
  func.func @transform_7(%arg0: i32) -> (i32, i32) {
    %c0_i32 = arith.constant 0 : i32
    %c0_i32_0 = arith.constant 0 : i32
    %c0_i32_1 = arith.constant 0 : i32
    return %c0_i32, %c0_i32_0 : i32, i32
  }
  func.func @transform_8(%arg0: i32) -> (i32, i32) {
    %c0_i32 = arith.constant 0 : i32
    %c0_i32_0 = arith.constant 0 : i32
    return %arg0, %c0_i32 : i32, i32
  }
}

module attributes {stable_mosaic.version = 11 : i64} {
  func.func @actor_kernel(%arg0: i32, %arg1: memref<8x256xbf16, #tpu.memory_space<vmem>>, %arg2: memref<8x128xbf16, #tpu.memory_space<vmem>>, %arg3: memref<256x128xbf16, #tpu.memory_space<vmem>>, %arg4: memref<128x128xbf16, #tpu.memory_space<vmem>>, %arg5: memref<128x128xbf16, #tpu.memory_space<vmem>>, %arg6: memref<128x128xf32, #tpu.memory_space<vmem>>, %arg7: memref<2x128xf32, #tpu.memory_space<vmem>>, %arg8: memref<3x128xf32, #tpu.memory_space<vmem>>, %arg9: memref<8x128xf32, #tpu.memory_space<vmem>>) attributes {dimension_semantics = [#tpu.dimension_semantics<parallel>], iteration_bounds = array<i64: 1>, scalar_prefetch = 0 : i64, scratch_operands = 0 : i64, tpu.core_type = #tpu.core_type<tc>, window_params = [{transform_indices = @transform_0, window_bounds = array<i64: 8, 256>}, {transform_indices = @transform_1, window_bounds = array<i64: 8, 128>}, {pipeline_mode = #tpu.pipeline_mode<synchronous>, transform_indices = @transform_2, window_bounds = array<i64: 256, 128>}, {pipeline_mode = #tpu.pipeline_mode<synchronous>, transform_indices = @transform_3, window_bounds = array<i64: 128, 128>}, {pipeline_mode = #tpu.pipeline_mode<synchronous>, transform_indices = @transform_4, window_bounds = array<i64: 128, 128>}, {pipeline_mode = #tpu.pipeline_mode<synchronous>, transform_indices = @transform_5, window_bounds = array<i64: 128, 128>}, {pipeline_mode = #tpu.pipeline_mode<synchronous>, transform_indices = @transform_6, window_bounds = array<i64: 2, 128>}, {pipeline_mode = #tpu.pipeline_mode<synchronous>, transform_indices = @transform_7, window_bounds = array<i64: 3, 128>}, {transform_indices = @transform_8, window_bounds = array<i64: 8, 128>}]} {
    %c0 = arith.constant 0 : index
    %c0_0 = arith.constant 0 : index
    %0 = vector.load %arg1[%c0, %c0_0] : memref<8x256xbf16, #tpu.memory_space<vmem>>, vector<8x256xbf16>
    %c0_1 = arith.constant 0 : index
    %c0_2 = arith.constant 0 : index
    %1 = vector.load %arg2[%c0_1, %c0_2] : memref<8x128xbf16, #tpu.memory_space<vmem>>, vector<8x128xbf16>
    %c0_3 = arith.constant 0 : index
    %c0_4 = arith.constant 0 : index
    %2 = vector.load %arg7[%c0_3, %c0_4] : memref<2x128xf32, #tpu.memory_space<vmem>>, vector<1x128xf32>
    %c1 = arith.constant 1 : index
    %c0_5 = arith.constant 0 : index
    %3 = vector.load %arg7[%c1, %c0_5] : memref<2x128xf32, #tpu.memory_space<vmem>>, vector<1x128xf32>
    %c0_6 = arith.constant 0 : index
    %c0_7 = arith.constant 0 : index
    %4 = vector.load %arg8[%c0_6, %c0_7] : memref<3x128xf32, #tpu.memory_space<vmem>>, vector<1x128xf32>
    %c1_8 = arith.constant 1 : index
    %c0_9 = arith.constant 0 : index
    %5 = vector.load %arg8[%c1_8, %c0_9] : memref<3x128xf32, #tpu.memory_space<vmem>>, vector<1x128xf32>
    %c2 = arith.constant 2 : index
    %c0_10 = arith.constant 0 : index
    %6 = vector.load %arg8[%c2, %c0_10] : memref<3x128xf32, #tpu.memory_space<vmem>>, vector<1x128xf32>
    %c0_11 = arith.constant 0 : index
    %c0_12 = arith.constant 0 : index
    %7 = vector.load %arg3[%c0_11, %c0_12] : memref<256x128xbf16, #tpu.memory_space<vmem>>, vector<256x128xbf16>
    %cst = arith.constant dense<0.000000e+00> : vector<8x128xf32>
    %8 = tpu.matmul %0, %7, %cst {dimension_numbers = #tpu.dot_dimension_numbers<[1], [0], [0], [1], [0, 0, 1, 1], [], []>} : vector<8x256xbf16>, vector<256x128xbf16>, vector<8x128xf32> -> vector<8x128xf32>
    %c0_13 = arith.constant 0 : index
    %c0_14 = arith.constant 0 : index
    %9 = vector.load %arg4[%c0_13, %c0_14] : memref<128x128xbf16, #tpu.memory_space<vmem>>, vector<128x128xbf16>
    %cst_15 = arith.constant dense<0.000000e+00> : vector<8x128xf32>
    %10 = tpu.matmul %1, %9, %cst_15 {dimension_numbers = #tpu.dot_dimension_numbers<[1], [0], [0], [1], [0, 0, 1, 1], [], []>} : vector<8x128xbf16>, vector<128x128xbf16>, vector<8x128xf32> -> vector<8x128xf32>
    %11 = arith.addf %8, %10 : vector<8x128xf32>
    %12 = vector.broadcast %2 : vector<1x128xf32> to vector<8x128xf32>
    %13 = arith.addf %11, %12 : vector<8x128xf32>
    %cst_16 = arith.constant 0.000000e+00 : f32
    %14 = vector.broadcast %cst_16 : f32 to vector<8x128xf32>
    %15 = arith.cmpf ogt, %13, %14 : vector<8x128xf32>
    %cst_17 = arith.constant 0.00999999977 : f32
    %16 = vector.broadcast %cst_17 : f32 to vector<8x128xf32>
    %17 = arith.mulf %16, %13 : vector<8x128xf32>
    %18 = arith.select %15, %13, %17 : vector<8x128xi1>, vector<8x128xf32>
    %19 = arith.truncf %18 : vector<8x128xf32> to vector<8x128xbf16>
    %c0_18 = arith.constant 0 : index
    %c0_19 = arith.constant 0 : index
    %20 = vector.load %arg5[%c0_18, %c0_19] : memref<128x128xbf16, #tpu.memory_space<vmem>>, vector<128x128xbf16>
    %cst_20 = arith.constant dense<0.000000e+00> : vector<8x128xf32>
    %21 = tpu.matmul %19, %20, %cst_20 {dimension_numbers = #tpu.dot_dimension_numbers<[1], [0], [0], [1], [0, 0, 1, 1], [], []>} : vector<8x128xbf16>, vector<128x128xbf16>, vector<8x128xf32> -> vector<8x128xf32>
    %22 = vector.broadcast %3 : vector<1x128xf32> to vector<8x128xf32>
    %23 = arith.addf %21, %22 : vector<8x128xf32>
    %cst_21 = arith.constant 0.000000e+00 : f32
    %24 = vector.broadcast %cst_21 : f32 to vector<8x128xf32>
    %25 = arith.cmpf ogt, %23, %24 : vector<8x128xf32>
    %cst_22 = arith.constant 0.00999999977 : f32
    %26 = vector.broadcast %cst_22 : f32 to vector<8x128xf32>
    %27 = arith.mulf %26, %23 : vector<8x128xf32>
    %28 = arith.select %25, %23, %27 : vector<8x128xi1>, vector<8x128xf32>
    %c0_23 = arith.constant 0 : index
    %c0_24 = arith.constant 0 : index
    %29 = vector.load %arg6[%c0_23, %c0_24] : memref<128x128xf32, #tpu.memory_space<vmem>>, vector<128x128xf32>
    %cst_25 = arith.constant dense<0.000000e+00> : vector<8x128xf32>
    %30 = tpu.matmul %28, %29, %cst_25 {dimension_numbers = #tpu.dot_dimension_numbers<[1], [0], [0], [1], [0, 0, 1, 1], [], []>} : vector<8x128xf32>, vector<128x128xf32>, vector<8x128xf32> -> vector<8x128xf32>
    %31 = vector.broadcast %4 : vector<1x128xf32> to vector<8x128xf32>
    %32 = arith.addf %30, %31 : vector<8x128xf32>
    %33 = tpu.iota {dimensions = array<i32: 1>} : vector<8x128xi32>
    %cst_26 = arith.constant 0.000000e+00 : f32
    %34 = vector.broadcast %cst_26 : f32 to vector<8x128xf32>
    %35 = arith.maximumf %32, %34 : vector<8x128xf32>
    %36 = vector.broadcast %cst_26 : f32 to vector<8x128xf32>
    %37 = arith.subf %32, %36 : vector<8x128xf32>
    %38 = arith.cmpf one, %37, %37 : vector<8x128xf32>
    %39 = vector.broadcast %cst_26 : f32 to vector<8x128xf32>
    %40 = arith.addf %32, %39 : vector<8x128xf32>
    %41 = math.absf %37 : vector<8x128xf32>
    %cst_27 = arith.constant 0.000000e+00 : f32
    %42 = vector.broadcast %cst_27 : f32 to vector<8x128xf32>
    %43 = arith.subf %42, %41 : vector<8x128xf32>
    %44 = math.exp %43 : vector<8x128xf32>
    %45 = math.log1p %44 : vector<8x128xf32>
    %46 = arith.addf %35, %45 : vector<8x128xf32>
    %47 = arith.select %38, %40, %46 : vector<8x128xi1>, vector<8x128xf32>
    %cst_28 = arith.constant 9.99999974E-6 : f32
    %48 = vector.broadcast %cst_28 : f32 to vector<8x128xf32>
    %49 = arith.addf %47, %48 : vector<8x128xf32>
    %50 = arith.negf %32 : vector<8x128xf32>
    %51 = math.exp %50 : vector<8x128xf32>
    %cst_29 = arith.constant 1.000000e+00 : f32
    %52 = vector.broadcast %cst_29 : f32 to vector<8x128xf32>
    %53 = arith.addf %52, %51 : vector<8x128xf32>
    %54 = arith.divf %52, %53 : vector<8x128xf32>
    %55 = vector.broadcast %6 : vector<1x128xf32> to vector<8x128xf32>
    %56 = arith.mulf %55, %54 : vector<8x128xf32>
    %57 = vector.broadcast %5 : vector<1x128xf32> to vector<8x128xf32>
    %58 = arith.addf %57, %56 : vector<8x128xf32>
    %c4_i32 = arith.constant 4 : i32
    %59 = vector.broadcast %c4_i32 : i32 to vector<8x128xi32>
    %60 = arith.cmpi slt, %33, %59 : vector<8x128xi32>
    %c8_i32 = arith.constant 8 : i32
    %61 = vector.broadcast %c8_i32 : i32 to vector<8x128xi32>
    %62 = arith.cmpi slt, %33, %61 : vector<8x128xi32>
    %63 = arith.select %62, %49, %58 : vector<8x128xi1>, vector<8x128xf32>
    %64 = arith.select %60, %32, %63 : vector<8x128xi1>, vector<8x128xf32>
    %c0_30 = arith.constant 0 : index
    %c0_31 = arith.constant 0 : index
    %65 = vector.load %arg9[%c0_30, %c0_31] : memref<8x128xf32, #tpu.memory_space<vmem>>, vector<8x128xf32>
    tpu.vector_store %arg9[%c0_30, %c0_31], %64 {strides = array<i32>} : memref<8x128xf32, #tpu.memory_space<vmem>>, vector<8x128xf32>,
    return
  }
  func.func @transform_0(%arg0: i32) -> (i32, i32) {
    %c0_i32 = arith.constant 0 : i32
    %c0_i32_0 = arith.constant 0 : i32
    return %arg0, %c0_i32 : i32, i32
  }
  func.func @transform_1(%arg0: i32) -> (i32, i32) {
    %c0_i32 = arith.constant 0 : i32
    %c0_i32_0 = arith.constant 0 : i32
    return %arg0, %c0_i32 : i32, i32
  }
  func.func @transform_2(%arg0: i32) -> (i32, i32) {
    %c0_i32 = arith.constant 0 : i32
    %c0_i32_0 = arith.constant 0 : i32
    %c0_i32_1 = arith.constant 0 : i32
    return %c0_i32, %c0_i32_0 : i32, i32
  }
  func.func @transform_3(%arg0: i32) -> (i32, i32) {
    %c0_i32 = arith.constant 0 : i32
    %c0_i32_0 = arith.constant 0 : i32
    %c0_i32_1 = arith.constant 0 : i32
    return %c0_i32, %c0_i32_0 : i32, i32
  }
  func.func @transform_4(%arg0: i32) -> (i32, i32) {
    %c0_i32 = arith.constant 0 : i32
    %c0_i32_0 = arith.constant 0 : i32
    %c0_i32_1 = arith.constant 0 : i32
    return %c0_i32, %c0_i32_0 : i32, i32
  }
  func.func @transform_5(%arg0: i32) -> (i32, i32) {
    %c0_i32 = arith.constant 0 : i32
    %c0_i32_0 = arith.constant 0 : i32
    %c0_i32_1 = arith.constant 0 : i32
    return %c0_i32, %c0_i32_0 : i32, i32
  }
  func.func @transform_6(%arg0: i32) -> (i32, i32) {
    %c0_i32 = arith.constant 0 : i32
    %c0_i32_0 = arith.constant 0 : i32
    %c0_i32_1 = arith.constant 0 : i32
    return %c0_i32, %c0_i32_0 : i32, i32
  }
  func.func @transform_7(%arg0: i32) -> (i32, i32) {
    %c0_i32 = arith.constant 0 : i32
    %c0_i32_0 = arith.constant 0 : i32
    %c0_i32_1 = arith.constant 0 : i32
    return %c0_i32, %c0_i32_0 : i32, i32
  }
  func.func @transform_8(%arg0: i32) -> (i32, i32) {
    %c0_i32 = arith.constant 0 : i32
    %c0_i32_0 = arith.constant 0 : i32
    return %arg0, %c0_i32 : i32, i32
  }
}

</mosaic_0001>

<llo_original>
// kernel: tpu_custom_call.1
$region0: #{tpu_custom_call.1}
  #allocation0 [shape = 'u32[]', space=smem, size = 0x4, offset = 0x4, fixed_abs, tag = 'smem constant byte address 0x4 - core index']
  #allocation1 [shape = 'u32[72,128]{1,0:T(1,128)}', space=vmem, size = 0x9000, scoped, tag = 'internal scratch']
  %s0 = inlined_call_operand.hbm [shape: bf16[8,256], index: 0, kind: input, shape index: {}]
  %s1 = inlined_call_operand.hbm [shape: bf16[8,128], index: 1, kind: input, shape index: {}]
  %s2 = inlined_call_operand.hbm [shape: bf16[256,128], index: 2, kind: input, shape index: {}]
  %s3 = inlined_call_operand.hbm [shape: bf16[128,128], index: 3, kind: input, shape index: {}]
  %s4 = inlined_call_operand.hbm [shape: bf16[128,128], index: 4, kind: input, shape index: {}]
  %s5 = inlined_call_operand.hbm [shape: f32[128,128], index: 5, kind: input, shape index: {}]
  %s6 = inlined_call_operand.vmem [shape: f32[2,128], index: 6, kind: input, shape index: {}]
  %s7 = inlined_call_operand.vmem [shape: f32[3,128], index: 7, kind: input, shape index: {}]
  %s8 = inlined_call_operand.hbm [shape: f32[8,128], index: 8, kind: output, shape index: {}]
  %s9 = sld [smem:[#allocation0]]
  $region66: #{tpu_custom_call.1} parent=0
    _
  %s11 = ssub.s32 1, %s9
  %s12 = scalar_select 0, %s11, %s9
  $region1: #{tpu_custom_call.1} parent=0
    #allocation2 [shape = 'u8[4096]{0}', space=vmem, size = 0x1000, scoped, tag = 'input window, operand 0, single buffered']
    #allocation3 [shape = 's32[1]{0}', space=sflag, size = 0x4, scoped, tag = 'scoped memory for tpu_custom_call.1']
    #allocation4 [shape = 's32[1]{0}', space=sflag, size = 0x4, scoped, tag = 'scoped memory for tpu_custom_call.1']
    #allocation5 [shape = 'u8[2048]{0}', space=vmem, size = 0x800, scoped, tag = 'input window, operand 1, single buffered']
    #allocation6 [shape = 's32[1]{0}', space=sflag, size = 0x4, scoped, tag = 'scoped memory for tpu_custom_call.1']
    #allocation7 [shape = 'u8[65536]{0}', space=vmem, size = 0x10000, scoped, tag = 'input window, operand 2, single buffered']
    #allocation8 [shape = 'u8[32768]{0}', space=vmem, size = 0x8000, scoped, tag = 'input window, operand 3, single buffered']
    #allocation9 [shape = 's32[1]{0}', space=sflag, size = 0x4, scoped, tag = 'scoped memory for tpu_custom_call.1']
    #allocation10 [shape = 'u8[32768]{0}', space=vmem, size = 0x8000, scoped, tag = 'input window, operand 4, single buffered']
    #allocation11 [shape = 'u8[65536]{0}', space=vmem, size = 0x10000, scoped, tag = 'input window, operand 5, single buffered']
    #allocation12 [shape = 's32[1]{0}', space=sflag, size = 0x4, scoped, tag = 'scoped memory for tpu_custom_call.1']
    #allocation13 [shape = 'u8[4096]{0}', space=vmem, size = 0x1000, scoped, tag = 'output window, operand 0, single buffered']
    %13 = vsyncpa [#allocation3], 0
    %14 = vsyncpa [#allocation6], 0
    %15 = vsyncpa [#allocation9], 0
    %16 = vsyncpa [#allocation12], 0
    %17 = vsyncpa [#allocation4], 0
    // Predicated region
    $region2: #{tpu_custom_call.1} parent=1 // pred_check
      _
    $region3: #{tpu_custom_call.1} parent=1 // pred_check_branch
      %19 = sbr.rel (0) target = $region5
    $region4: #{tpu_custom_call.1} parent=1 // pred_region
      %21 = vsyncadd [#allocation3], 0
      %s23 = sshll.u32 %s0, 4
      %s24 = int_to_ptr.hbm [resolvable:$true] %s23
      %s25 = sshll.u32 [#allocation2], 4
      %s26 = int_to_ptr.vmem [resolvable:$true] %s25
      %28 = dma.hbm_to_vmem [thread:$0]  %s24, 128, %s26, [#allocation3]
    $region5: #{tpu_custom_call.1} parent=1 // pred_fallthru
      _
    // Predicated region
    $region6: #{tpu_custom_call.1} parent=1 // pred_check
      _
    $region7: #{tpu_custom_call.1} parent=1 // pred_check_branch
      %30 = sbr.rel (0) target = $region9
    $region8: #{tpu_custom_call.1} parent=1 // pred_region
      %32 = vsyncadd [#allocation6], 0
      %s34 = sshll.u32 %s1, 4
      %s35 = int_to_ptr.hbm [resolvable:$true] %s34
      %s36 = sshll.u32 [#allocation5], 4
      %s37 = int_to_ptr.vmem [resolvable:$true] %s36
      %39 = dma.hbm_to_vmem [thread:$0]  %s35, 64, %s37, [#allocation6]
    $region9: #{tpu_custom_call.1} parent=1 // pred_fallthru
      _
    // Predicated region
    $region10: #{tpu_custom_call.1} parent=1 // pred_check
      _
    $region11: #{tpu_custom_call.1} parent=1 // pred_check_branch
      %41 = sbr.rel (0) target = $region13
    $region12: #{tpu_custom_call.1} parent=1 // pred_region
      %43 = vsyncadd [#allocation6], 0
      %s44 = sshll.u32 %s2, 4
      %s45 = int_to_ptr.hbm [resolvable:$true] %s44
      %s46 = sshll.u32 [#allocation7], 4
      %s47 = int_to_ptr.vmem [resolvable:$true] %s46
      %52 = dma.hbm_to_vmem [thread:$0]  %s45, 2048, %s47, [#allocation6], 64, 64, 4
    $region13: #{tpu_custom_call.1} parent=1 // pred_fallthru
      _
    // Predicated region
    $region14: #{tpu_custom_call.1} parent=1 // pred_check
      _
    $region15: #{tpu_custom_call.1} parent=1 // pred_check_branch
      %54 = sbr.rel (0) target = $region17
    $region16: #{tpu_custom_call.1} parent=1 // pred_region
      %56 = vsyncadd [#allocation9], 0
      %s57 = sshll.u32 %s3, 4
      %s58 = int_to_ptr.hbm [resolvable:$true] %s57
      %s59 = sshll.u32 [#allocation8], 4
      %s60 = int_to_ptr.vmem [resolvable:$true] %s59
      %65 = dma.hbm_to_vmem [thread:$0]  %s58, 1024, %s60, [#allocation9], 64, 64, 4
    $region17: #{tpu_custom_call.1} parent=1 // pred_fallthru
      _
    // Predicated region
    $region18: #{tpu_custom_call.1} parent=1 // pred_check
      _
    $region19: #{tpu_custom_call.1} parent=1 // pred_check_branch
      %67 = sbr.rel (0) target = $region21
    $region20: #{tpu_custom_call.1} parent=1 // pred_region
      %69 = vsyncadd [#allocation9], 0
      %s70 = sshll.u32 %s4, 4
      %s71 = int_to_ptr.hbm [resolvable:$true] %s70
      %s72 = sshll.u32 [#allocation10], 4
      %s73 = int_to_ptr.vmem [resolvable:$true] %s72
      %78 = dma.hbm_to_vmem [thread:$0]  %s71, 1024, %s73, [#allocation9], 64, 64, 4
    $region21: #{tpu_custom_call.1} parent=1 // pred_fallthru
      _
    // Predicated region
    $region22: #{tpu_custom_call.1} parent=1 // pred_check
      _
    $region23: #{tpu_custom_call.1} parent=1 // pred_check_branch
      %80 = sbr.rel (0) target = $region25
    $region24: #{tpu_custom_call.1} parent=1 // pred_region
      %82 = vsyncadd [#allocation12], 0
      %s83 = sshll.u32 %s5, 4
      %s84 = int_to_ptr.hbm [resolvable:$true] %s83
      %s85 = sshll.u32 [#allocation11], 4
      %s86 = int_to_ptr.vmem [resolvable:$true] %s85
      %91 = dma.hbm_to_vmem [thread:$0]  %s84, 2048, %s86, [#allocation12], 128, 128, 8
    $region25: #{tpu_custom_call.1} parent=1 // pred_fallthru
      _
    // Predicated region
    $region26: #{tpu_custom_call.1} parent=1 // pred_check
      _
    $region27: #{tpu_custom_call.1} parent=1 // pred_check_branch
      %93 = sbr.rel (0) target = $region29
    $region28: #{tpu_custom_call.1} parent=1 // pred_region
      _
    $region29: #{tpu_custom_call.1} parent=1 // pred_fallthru
      _
    // Predicated region
    $region30: #{tpu_custom_call.1} parent=1 // pred_check
      _
    $region31: #{tpu_custom_call.1} parent=1 // pred_check_branch
      %95 = sbr.rel (0) target = $region33
    $region32: #{tpu_custom_call.1} parent=1 // pred_region
      _
    $region33: #{tpu_custom_call.1} parent=1 // pred_fallthru
      _
    // Predicated region
    $region34: #{tpu_custom_call.1} parent=1 // pred_check
      _
    $region35: #{tpu_custom_call.1} parent=1 // pred_check_branch
      %97 = sbr.rel (0) target = $region37
    $region36: #{tpu_custom_call.1} parent=1 // pred_region
      %99 = dma.done [#allocation3], 128
    $region37: #{tpu_custom_call.1} parent=1 // pred_fallthru
      _
    // Predicated region
    $region38: #{tpu_custom_call.1} parent=1 // pred_check
      _
    $region39: #{tpu_custom_call.1} parent=1 // pred_check_branch
      %101 = sbr.rel (0) target = $region41
    $region40: #{tpu_custom_call.1} parent=1 // pred_region
      %103 = dma.done [#allocation6], 64
    $region41: #{tpu_custom_call.1} parent=1 // pred_fallthru
      _
    // Predicated region
    $region42: #{tpu_custom_call.1} parent=1 // pred_check
      _
    $region43: #{tpu_custom_call.1} parent=1 // pred_check_branch
      %105 = sbr.rel (0) target = $region45
    $region44: #{tpu_custom_call.1} parent=1 // pred_region
      %107 = dma.done [#allocation6], 2048
    $region45: #{tpu_custom_call.1} parent=1 // pred_fallthru
      _
    // Predicated region
    $region46: #{tpu_custom_call.1} parent=1 // pred_check
      _
    $region47: #{tpu_custom_call.1} parent=1 // pred_check_branch
      %109 = sbr.rel (0) target = $region49
    $region48: #{tpu_custom_call.1} parent=1 // pred_region
      %111 = dma.done [#allocation9], 1024
    $region49: #{tpu_custom_call.1} parent=1 // pred_fallthru
      _
    // Predicated region
    $region50: #{tpu_custom_call.1} parent=1 // pred_check
      _
    $region51: #{tpu_custom_call.1} parent=1 // pred_check_branch
      %113 = sbr.rel (0) target = $region53
    $region52: #{tpu_custom_call.1} parent=1 // pred_region
      %115 = dma.done [#allocation9], 1024
    $region53: #{tpu_custom_call.1} parent=1 // pred_fallthru
      _
    // Predicated region
    $region54: #{tpu_custom_call.1} parent=1 // pred_check
      _
    $region55: #{tpu_custom_call.1} parent=1 // pred_check_branch
      %117 = sbr.rel (0) target = $region57
    $region56: #{tpu_custom_call.1} parent=1 // pred_region
      %119 = dma.done [#allocation12], 2048
    $region57: #{tpu_custom_call.1} parent=1 // pred_fallthru
      _
    %v120 = vld [vmem:[#allocation2] sm:$0xff]
    %v121 = vld [vmem:[#allocation5] sm:$0xf]
    %v122 = vld [vmem:[%s6] sm:$0x1]
    %v123 = vld [vmem:[%s6 + $0x1] sm:$0x1]
    %v124 = vld [vmem:[%s7] sm:$0x1]
    %v125 = vld [vmem:[%s7 + $0x1] sm:$0x1]
    %v126 = vld [vmem:[%s7 + $0x2] sm:$0x1]
    %v127 = vld [vmem:[#allocation7] sm:$0xf]
    %v128 = vld [vmem:[#allocation7 + $0x4] sm:$0xf]
    %v129 = vld [vmem:[#allocation7 + $0x8] sm:$0xf]
    %v130 = vld [vmem:[#allocation7 + $0xc] sm:$0xf]
    %v131 = vld [vmem:[#allocation7 + $0x10] sm:$0xf]
    %v132 = vld [vmem:[#allocation7 + $0x14] sm:$0xf]
    %v133 = vld [vmem:[#allocation7 + $0x18] sm:$0xf]
    %v134 = vld [vmem:[#allocation7 + $0x1c] sm:$0xf]
    %v135 = vld [vmem:[#allocation7 + $0x20] sm:$0xf]
    %v136 = vld [vmem:[#allocation7 + $0x24] sm:$0xf]
    %v137 = vld [vmem:[#allocation7 + $0x28] sm:$0xf]
    %v138 = vld [vmem:[#allocation7 + $0x2c] sm:$0xf]
    %v139 = vld [vmem:[#allocation7 + $0x30] sm:$0xf]
    %v140 = vld [vmem:[#allocation7 + $0x34] sm:$0xf]
    %v141 = vld [vmem:[#allocation7 + $0x38] sm:$0xf]
    %v142 = vld [vmem:[#allocation7 + $0x3c] sm:$0xf]
    %v143 = vld [vmem:[#allocation7 + $0x40] sm:$0xf]
    %v144 = vld [vmem:[#allocation7 + $0x44] sm:$0xf]
    %v145 = vld [vmem:[#allocation7 + $0x48] sm:$0xf]
    %v146 = vld [vmem:[#allocation7 + $0x4c] sm:$0xf]
    %v147 = vld [vmem:[#allocation7 + $0x50] sm:$0xf]
    %v148 = vld [vmem:[#allocation7 + $0x54] sm:$0xf]
    %v149 = vld [vmem:[#allocation7 + $0x58] sm:$0xf]
    %v150 = vld [vmem:[#allocation7 + $0x5c] sm:$0xf]
    %v151 = vld [vmem:[#allocation7 + $0x60] sm:$0xf]
    %v152 = vld [vmem:[#allocation7 + $0x64] sm:$0xf]
    %v153 = vld [vmem:[#allocation7 + $0x68] sm:$0xf]
    %v154 = vld [vmem:[#allocation7 + $0x6c] sm:$0xf]
    %v155 = vld [vmem:[#allocation7 + $0x70] sm:$0xf]
    %v156 = vld [vmem:[#allocation7 + $0x74] sm:$0xf]
    %v157 = vld [vmem:[#allocation7 + $0x78] sm:$0xf]
    %v158 = vld [vmem:[#allocation7 + $0x7c] sm:$0xf]
    %v159 = vld [vmem:[#allocation8] sm:$0xf]
    %v160 = vld [vmem:[#allocation8 + $0x4] sm:$0xf]
    %v161 = vld [vmem:[#allocation8 + $0x8] sm:$0xf]
    %v162 = vld [vmem:[#allocation8 + $0xc] sm:$0xf]
    %v163 = vld [vmem:[#allocation8 + $0x10] sm:$0xf]
    %v164 = vld [vmem:[#allocation8 + $0x14] sm:$0xf]
    %v165 = vld [vmem:[#allocation8 + $0x18] sm:$0xf]
    %v166 = vld [vmem:[#allocation8 + $0x1c] sm:$0xf]
    %v167 = vld [vmem:[#allocation8 + $0x20] sm:$0xf]
    %v168 = vld [vmem:[#allocation8 + $0x24] sm:$0xf]
    %v169 = vld [vmem:[#allocation8 + $0x28] sm:$0xf]
    %v170 = vld [vmem:[#allocation8 + $0x2c] sm:$0xf]
    %v171 = vld [vmem:[#allocation8 + $0x30] sm:$0xf]
    %v172 = vld [vmem:[#allocation8 + $0x34] sm:$0xf]
    %v173 = vld [vmem:[#allocation8 + $0x38] sm:$0xf]
    %v174 = vld [vmem:[#allocation8 + $0x3c] sm:$0xf]
    %v191 = vunpack.c.l.b16 %v159
    %v192 = vunpack.c.l.b16 %v160
    %v193 = vunpack.c.l.b16 %v161
    %v194 = vunpack.c.l.b16 %v162
    %v195 = vunpack.c.l.b16 %v163
    %v196 = vunpack.c.l.b16 %v164
    %v197 = vunpack.c.l.b16 %v165
    %v198 = vunpack.c.l.b16 %v166
    %v199 = vunpack.c.l.b16 %v167
    %v200 = vunpack.c.l.b16 %v168
    %v201 = vunpack.c.l.b16 %v169
    %v202 = vunpack.c.l.b16 %v170
    %v203 = vunpack.c.l.b16 %v171
    %v204 = vunpack.c.l.b16 %v172
    %v205 = vunpack.c.l.b16 %v173
    %v206 = vunpack.c.l.b16 %v174
    %v207 = vpack.c.b16 %v192, %v191
    %v208 = vpack.c.b16 %v194, %v193
    %v209 = vpack.c.b16 %v196, %v195
    %v210 = vpack.c.b16 %v198, %v197
    %v211 = vpack.c.b16 %v200, %v199
    %v212 = vpack.c.b16 %v202, %v201
    %v213 = vpack.c.b16 %v204, %v203
    %v214 = vpack.c.b16 %v206, %v205
    %223 = vmatpush.bf16.msra.mxu0 %v214
    %224 = vmatpush.bf16.msra.mxu0 %v213
    %225 = vmatpush.bf16.msra.mxu0 %v212
    %226 = vmatpush.bf16.msra.mxu0 %v211
    %227 = vmatpush.bf16.msra.mxu0 %v210
    %228 = vmatpush.bf16.msra.mxu0 %v209
    %229 = vmatpush.bf16.msra.mxu0 %v208
    %230 = vmatpush.bf16.msra.mxu0 %v207
    %231 = vmatmul.bf16.gmra.mxu0 %v121
    %v232 = vpop.f32.mrf.mxu0
    %v233 = vadd.f32 0.0, %v232
    %v234 = vpop.f32.mrf.mxu0
    %235 = vdwg.mxu0
    %v237 = vunpack.c.l.b16 %v120
    %v238 = vunpack.c.h.b16 %v120
    %v239 = vpack.c.b16 %v237, %v237
    %v240 = vpack.c.b16 %v238, %v238
    %v275 = vunpack.c.l.b16 %v127
    %v276 = vunpack.c.l.b16 %v128
    %v277 = vunpack.c.l.b16 %v129
    %v278 = vunpack.c.l.b16 %v130
    %v279 = vunpack.c.l.b16 %v131
    %v280 = vunpack.c.l.b16 %v132
    %v281 = vunpack.c.l.b16 %v133
    %v282 = vunpack.c.l.b16 %v134
    %v283 = vunpack.c.l.b16 %v135
    %v284 = vunpack.c.l.b16 %v136
    %v285 = vunpack.c.l.b16 %v137
    %v286 = vunpack.c.l.b16 %v138
    %v287 = vunpack.c.l.b16 %v139
    %v288 = vunpack.c.l.b16 %v140
    %v289 = vunpack.c.l.b16 %v141
    %v290 = vunpack.c.l.b16 %v142
    %v291 = vunpack.c.l.b16 %v143
    %v292 = vunpack.c.l.b16 %v144
    %v293 = vunpack.c.l.b16 %v145
    %v294 = vunpack.c.l.b16 %v146
    %v295 = vunpack.c.l.b16 %v147
    %v296 = vunpack.c.l.b16 %v148
    %v297 = vunpack.c.l.b16 %v149
    %v298 = vunpack.c.l.b16 %v150
    %v299 = vunpack.c.l.b16 %v151
    %v300 = vunpack.c.l.b16 %v152
    %v301 = vunpack.c.l.b16 %v153
    %v302 = vunpack.c.l.b16 %v154
    %v303 = vunpack.c.l.b16 %v155
    %v304 = vunpack.c.l.b16 %v156
    %v305 = vunpack.c.l.b16 %v157
    %v306 = vunpack.c.l.b16 %v158
    %v307 = vpack.c.b16 %v276, %v275
    %v308 = vpack.c.b16 %v278, %v277
    %v309 = vpack.c.b16 %v280, %v279
    %v310 = vpack.c.b16 %v282, %v281
    %v311 = vpack.c.b16 %v284, %v283
    %v312 = vpack.c.b16 %v286, %v285
    %v313 = vpack.c.b16 %v288, %v287
    %v314 = vpack.c.b16 %v290, %v289
    %v315 = vpack.c.b16 %v292, %v291
    %v316 = vpack.c.b16 %v294, %v293
    %v317 = vpack.c.b16 %v296, %v295
    %v318 = vpack.c.b16 %v298, %v297
    %v319 = vpack.c.b16 %v300, %v299
    %v320 = vpack.c.b16 %v302, %v301
    %v321 = vpack.c.b16 %v304, %v303
    %v322 = vpack.c.b16 %v306, %v305
    %339 = vmatpush.bf16.msra.mxu0 %v314
    %340 = vmatpush.bf16.msra.mxu0 %v313
    %341 = vmatpush.bf16.msra.mxu0 %v312
    %342 = vmatpush.bf16.msra.mxu0 %v311
    %343 = vmatpush.bf16.msra.mxu0 %v310
    %344 = vmatpush.bf16.msra.mxu0 %v309
    %345 = vmatpush.bf16.msra.mxu0 %v308
    %346 = vmatpush.bf16.msra.mxu0 %v307
    %347 = vmatmul.bf16.gmra.mxu0 %v239
    %v348 = vpop.f32.mrf.mxu0
    %v349 = vadd.f32 %v233, %v348
    %v350 = vpop.f32.mrf.mxu0
    %351 = vdwg.mxu0
    %352 = vmatpush.bf16.msra.mxu0 %v322
    %353 = vmatpush.bf16.msra.mxu0 %v321
    %354 = vmatpush.bf16.msra.mxu0 %v320
    %355 = vmatpush.bf16.msra.mxu0 %v319
    %356 = vmatpush.bf16.msra.mxu0 %v318
    %357 = vmatpush.bf16.msra.mxu0 %v317
    %358 = vmatpush.bf16.msra.mxu0 %v316
    %359 = vmatpush.bf16.msra.mxu0 %v315
    %360 = vmatmul.bf16.gmra.mxu0 %v240
    %v361 = vpop.f32.mrf.mxu0
    %v362 = vadd.f32 %v349, %v361
    %v363 = vpop.f32.mrf.mxu0
    %364 = vdwg.mxu0
    %v365 = vperm.slane %v122, 0
    %v366 = vadd.f32 %v362, %v365
    %vm367 = vcmp.gt.f32.partialorder %v366, 0.0
    %v368 = vmul.f32 %v366, 0.01
    %v369 = vsel %vm367, %v366, %v368
    %v370 = vpack.c.bf16 %v369, %v369
    %v371 = vld [vmem:[#allocation10] sm:$0xf]
    %v372 = vld [vmem:[#allocation10 + $0x4] sm:$0xf]
    %v373 = vld [vmem:[#allocation10 + $0x8] sm:$0xf]
    %v374 = vld [vmem:[#allocation10 + $0xc] sm:$0xf]
    %v375 = vld [vmem:[#allocation10 + $0x10] sm:$0xf]
    %v376 = vld [vmem:[#allocation10 + $0x14] sm:$0xf]
    %v377 = vld [vmem:[#allocation10 + $0x18] sm:$0xf]
    %v378 = vld [vmem:[#allocation10 + $0x1c] sm:$0xf]
    %v379 = vld [vmem:[#allocation10 + $0x20] sm:$0xf]
    %v380 = vld [vmem:[#allocation10 + $0x24] sm:$0xf]
    %v381 = vld [vmem:[#allocation10 + $0x28] sm:$0xf]
    %v382 = vld [vmem:[#allocation10 + $0x2c] sm:$0xf]
    %v383 = vld [vmem:[#allocation10 + $0x30] sm:$0xf]
    %v384 = vld [vmem:[#allocation10 + $0x34] sm:$0xf]
    %v385 = vld [vmem:[#allocation10 + $0x38] sm:$0xf]
    %v386 = vld [vmem:[#allocation10 + $0x3c] sm:$0xf]
    %v387 = vperm.slane %v123, 0
    %v404 = vunpack.c.l.b16 %v371
    %v405 = vunpack.c.l.b16 %v372
    %v406 = vunpack.c.l.b16 %v373
    %v407 = vunpack.c.l.b16 %v374
    %v408 = vunpack.c.l.b16 %v375
    %v409 = vunpack.c.l.b16 %v376
    %v410 = vunpack.c.l.b16 %v377
    %v411 = vunpack.c.l.b16 %v378
    %v412 = vunpack.c.l.b16 %v379
    %v413 = vunpack.c.l.b16 %v380
    %v414 = vunpack.c.l.b16 %v381
    %v415 = vunpack.c.l.b16 %v382
    %v416 = vunpack.c.l.b16 %v383
    %v417 = vunpack.c.l.b16 %v384
    %v418 = vunpack.c.l.b16 %v385
    %v419 = vunpack.c.l.b16 %v386
    %v420 = vpack.c.b16 %v405, %v404
    %v421 = vpack.c.b16 %v407, %v406
    %v422 = vpack.c.b16 %v409, %v408
    %v423 = vpack.c.b16 %v411, %v410
    %v424 = vpack.c.b16 %v413, %v412
    %v425 = vpack.c.b16 %v415, %v414
    %v426 = vpack.c.b16 %v417, %v416
    %v427 = vpack.c.b16 %v419, %v418
    %436 = vmatpush.bf16.msra.mxu0 %v427
    %437 = vmatpush.bf16.msra.mxu0 %v426
    %438 = vmatpush.bf16.msra.mxu0 %v425
    %439 = vmatpush.bf16.msra.mxu0 %v424
    %440 = vmatpush.bf16.msra.mxu0 %v423
    %441 = vmatpush.bf16.msra.mxu0 %v422
    %442 = vmatpush.bf16.msra.mxu0 %v421
    %443 = vmatpush.bf16.msra.mxu0 %v420
    %444 = vmatmul.bf16.gmra.mxu0 %v370
    %v445 = vpop.f32.mrf.mxu0
    %v446 = vadd.f32 %v387, %v445
    %v447 = vpop.f32.mrf.mxu0
    %448 = vdwg.mxu0
    %vm449 = vcmp.gt.f32.partialorder %v446, 0.0
    %v450 = vmul.f32 %v446, 0.01
    %v451 = vsel %vm449, %v446, %v450
    %v452 = vld [vmem:[#allocation11] sm:$0xff]
    %v453 = vld [vmem:[#allocation11 + $0x8] sm:$0xff]
    %v454 = vld [vmem:[#allocation11 + $0x10] sm:$0xff]
    %v455 = vld [vmem:[#allocation11 + $0x18] sm:$0xff]
    %v456 = vld [vmem:[#allocation11 + $0x20] sm:$0xff]
    %v457 = vld [vmem:[#allocation11 + $0x28] sm:$0xff]
    %v458 = vld [vmem:[#allocation11 + $0x30] sm:$0xff]
    %v459 = vld [vmem:[#allocation11 + $0x38] sm:$0xff]
    %v460 = vld [vmem:[#allocation11 + $0x40] sm:$0xff]
    %v461 = vld [vmem:[#allocation11 + $0x48] sm:$0xff]
    %v462 = vld [vmem:[#allocation11 + $0x50] sm:$0xff]
    %v463 = vld [vmem:[#allocation11 + $0x58] sm:$0xff]
    %v464 = vld [vmem:[#allocation11 + $0x60] sm:$0xff]
    %v465 = vld [vmem:[#allocation11 + $0x68] sm:$0xff]
    %v466 = vld [vmem:[#allocation11 + $0x70] sm:$0xff]
    %v467 = vld [vmem:[#allocation11 + $0x78] sm:$0xff]
    %v468 = vperm.slane %v124, 0
    %469 = vmatpush.msra.mxu0 %v467
    %470 = vmatpush.msra.mxu0 %v466
    %471 = vmatpush.msra.mxu0 %v465
    %472 = vmatpush.msra.mxu0 %v464
    %473 = vmatpush.msra.mxu0 %v463
    %474 = vmatpush.msra.mxu0 %v462
    %475 = vmatpush.msra.mxu0 %v461
    %476 = vmatpush.msra.mxu0 %v460
    %477 = vmatpush.msra.mxu0 %v459
    %478 = vmatpush.msra.mxu0 %v458
    %479 = vmatpush.msra.mxu0 %v457
    %480 = vmatpush.msra.mxu0 %v456
    %481 = vmatpush.msra.mxu0 %v455
    %482 = vmatpush.msra.mxu0 %v454
    %483 = vmatpush.msra.mxu0 %v453
    %484 = vmatpush.msra.mxu0 %v452
    %485 = vmatmul.f32.gmra.mxu0 %v451
    %v486 = vpop.f32.mrf.mxu0
    %v487 = vadd.f32 %v468, %v486
    %488 = vdwg.mxu0
    %v489 = vlaneseq
    %v490 = vand.u32 %v489, 127
    %v491 = vmax.f32 %v487, 0.0
    %vm492 = vcmp.ne.f32.partialorder %v487, %v487
    %v493 = vadd.f32 %v487, 0.0
    %v494 = vand.u32 2147483647, %v487
    %v495 = vsub.f32 0.0, %v494
    %v496 = vmul.f32 %v495, 1.442695
    %v497 = vpow.pop %v496
    %v498 = vadd.f32 %v497, 1.0
    %v499 = vlog2.pop %v498
    %v500 = vmul.f32 %v499, 0.6931472
    %v501 = vmul.f32 -0.5, %v497
    %v502 = vadd.f32 %v501, 1.0
    %v503 = vmul.f32 %v502, %v497
    %v504 = vand.u32 2147483647, %v497
    %vm505 = vcmp.lt.f32.partialorder %v504, 0.0004427343
    %v506 = vsel %vm505, %v503, %v500
    %v507 = vadd.f32 %v491, %v506
    %v508 = vsel %vm492, %v493, %v507
    %v509 = vadd.f32 %v508, 1e-05
    %v510 = vxor.u32 %v487, 2147483648
    %v511 = vmul.f32 %v510, 1.442695
    %v512 = vpow.pop %v511
    %v513 = vadd.f32 %v512, 1.0
    %v514 = vrcp.pop %v513
    %v515 = vmul.f32 %v513, %v514
    %v516 = vsub.f32 1.0, %v515
    %v517 = vmul.f32 %v514, %v516
    %v518 = vadd.f32 %v514, %v517
    %vm519 = vweird.f32 %v513
    %vm520 = vweird.f32 %v514
    %vm521 = vmor %vm519, %vm520
    %v522 = vsel %vm521, %v514, %v518
    %v523 = vand.u32 2147483647, %v513
    %vm524 = vcmp.eq.f32.partialorder %v523, 8.507059e+37
    %v525 = vand.u32 %v513, 2147483648
    %v526 = vor.u32 1.1754944e-38, %v525
    %v527 = vsel %vm524, %v526, %v522
    %v528 = vmul.f32 1.0, %v527
    %v529 = vperm.slane %v126, 0
    %v530 = vmul.f32 %v529, %v528
    %v531 = vperm.slane %v125, 0
    %v532 = vadd.f32 %v531, %v530
    %vm533 = vcmp.lt.s32.totalorder %v490, 4
    %vm534 = vcmp.lt.s32.totalorder %v490, 8
    %v535 = vsel %vm534, %v509, %v532
    %v536 = vsel %vm533, %v487, %v535
    %537 = vst [vmem:[#allocation13] sm:$0xff] %v536
    // Predicated region
    $region58: #{tpu_custom_call.1} parent=1 // pred_check
      _
    $region59: #{tpu_custom_call.1} parent=1 // pred_check_branch
      %539 = sbr.rel (0) target = $region61
    $region60: #{tpu_custom_call.1} parent=1 // pred_region
      %541 = vsyncadd [#allocation4], 0
      %s543 = sshll.u32 [#allocation13], 4
      %s544 = int_to_ptr.vmem [resolvable:$true] %s543
      %s545 = sshll.u32 %s8, 4
      %s546 = int_to_ptr.hbm [resolvable:$true] %s545
      %548 = dma.vmem_to_hbm [thread:$0]  %s544, 128, %s546, [#allocation4]
    $region61: #{tpu_custom_call.1} parent=1 // pred_fallthru
      _
    // Predicated region
    $region62: #{tpu_custom_call.1} parent=1 // pred_check
      _
    $region63: #{tpu_custom_call.1} parent=1 // pred_check_branch
      %550 = sbr.rel (0) target = $region65
    $region64: #{tpu_custom_call.1} parent=1 // pred_region
      %552 = dma.done [#allocation4], 128
    $region65: #{tpu_custom_call.1} parent=1 // pred_fallthru
      _
    %553 = vsyncpa [#allocation3], 1
    %554 = vsyncpa [#allocation6], 1
    %555 = vsyncpa [#allocation9], 1
    %556 = vsyncpa [#allocation12], 1
    %557 = vsyncpa [#allocation4], 1

// kernel: tpu_custom_call.1
$region0: #{tpu_custom_call.1}
  #allocation0 [shape = 'u32[]', space=smem, size = 0x4, offset = 0x4, fixed_abs, tag = 'smem constant byte address 0x4 - core index']
  #allocation1 [shape = 'u32[72,128]{1,0:T(1,128)}', space=vmem, size = 0x9000, scoped, tag = 'internal scratch']
  %s0 = inlined_call_operand.hbm [shape: bf16[8,256], index: 0, kind: input, shape index: {}]
  %s1 = inlined_call_operand.hbm [shape: bf16[8,128], index: 1, kind: input, shape index: {}]
  %s2 = inlined_call_operand.hbm [shape: bf16[256,128], index: 2, kind: input, shape index: {}]
  %s3 = inlined_call_operand.hbm [shape: bf16[128,128], index: 3, kind: input, shape index: {}]
  %s4 = inlined_call_operand.hbm [shape: bf16[128,128], index: 4, kind: input, shape index: {}]
  %s5 = inlined_call_operand.hbm [shape: f32[128,128], index: 5, kind: input, shape index: {}]
  %s6 = inlined_call_operand.vmem [shape: f32[2,128], index: 6, kind: input, shape index: {}]
  %s7 = inlined_call_operand.vmem [shape: f32[3,128], index: 7, kind: input, shape index: {}]
  %s8 = inlined_call_operand.hbm [shape: f32[8,128], index: 8, kind: output, shape index: {}]
  %s9 = sld [smem:[#allocation0]]
  $region66: #{tpu_custom_call.1} parent=0
    _
  %s11 = ssub.s32 1, %s9
  %s12 = scalar_select 0, %s11, %s9
  $region1: #{tpu_custom_call.1} parent=0
    #allocation2 [shape = 'u8[4096]{0}', space=vmem, size = 0x1000, scoped, tag = 'input window, operand 0, single buffered']
    #allocation3 [shape = 's32[1]{0}', space=sflag, size = 0x4, scoped, tag = 'scoped memory for tpu_custom_call.1']
    #allocation4 [shape = 's32[1]{0}', space=sflag, size = 0x4, scoped, tag = 'scoped memory for tpu_custom_call.1']
    #allocation5 [shape = 'u8[2048]{0}', space=vmem, size = 0x800, scoped, tag = 'input window, operand 1, single buffered']
    #allocation6 [shape = 's32[1]{0}', space=sflag, size = 0x4, scoped, tag = 'scoped memory for tpu_custom_call.1']
    #allocation7 [shape = 'u8[65536]{0}', space=vmem, size = 0x10000, scoped, tag = 'input window, operand 2, single buffered']
    #allocation8 [shape = 'u8[32768]{0}', space=vmem, size = 0x8000, scoped, tag = 'input window, operand 3, single buffered']
    #allocation9 [shape = 's32[1]{0}', space=sflag, size = 0x4, scoped, tag = 'scoped memory for tpu_custom_call.1']
    #allocation10 [shape = 'u8[32768]{0}', space=vmem, size = 0x8000, scoped, tag = 'input window, operand 4, single buffered']
    #allocation11 [shape = 'u8[65536]{0}', space=vmem, size = 0x10000, scoped, tag = 'input window, operand 5, single buffered']
    #allocation12 [shape = 's32[1]{0}', space=sflag, size = 0x4, scoped, tag = 'scoped memory for tpu_custom_call.1']
    #allocation13 [shape = 'u8[4096]{0}', space=vmem, size = 0x1000, scoped, tag = 'output window, operand 0, single buffered']
    %13 = vsyncpa [#allocation3], 0
    %14 = vsyncpa [#allocation6], 0
    %15 = vsyncpa [#allocation9], 0
    %16 = vsyncpa [#allocation12], 0
    %17 = vsyncpa [#allocation4], 0
    // Predicated region
    $region2: #{tpu_custom_call.1} parent=1 // pred_check
      _
    $region3: #{tpu_custom_call.1} parent=1 // pred_check_branch
      %19 = sbr.rel (0) target = $region5
    $region4: #{tpu_custom_call.1} parent=1 // pred_region
      %21 = vsyncadd [#allocation3], 0
      %s23 = sshll.u32 %s0, 4
      %s24 = int_to_ptr.hbm [resolvable:$true] %s23
      %s25 = sshll.u32 [#allocation2], 4
      %s26 = int_to_ptr.vmem [resolvable:$true] %s25
      %28 = dma.hbm_to_vmem [thread:$0]  %s24, 128, %s26, [#allocation3]
    $region5: #{tpu_custom_call.1} parent=1 // pred_fallthru
      _
    // Predicated region
    $region6: #{tpu_custom_call.1} parent=1 // pred_check
      _
    $region7: #{tpu_custom_call.1} parent=1 // pred_check_branch
      %30 = sbr.rel (0) target = $region9
    $region8: #{tpu_custom_call.1} parent=1 // pred_region
      %32 = vsyncadd [#allocation6], 0
      %s34 = sshll.u32 %s1, 4
      %s35 = int_to_ptr.hbm [resolvable:$true] %s34
      %s36 = sshll.u32 [#allocation5], 4
      %s37 = int_to_ptr.vmem [resolvable:$true] %s36
      %39 = dma.hbm_to_vmem [thread:$0]  %s35, 64, %s37, [#allocation6]
    $region9: #{tpu_custom_call.1} parent=1 // pred_fallthru
      _
    // Predicated region
    $region10: #{tpu_custom_call.1} parent=1 // pred_check
      _
    $region11: #{tpu_custom_call.1} parent=1 // pred_check_branch
      %41 = sbr.rel (0) target = $region13
    $region12: #{tpu_custom_call.1} parent=1 // pred_region
      %43 = vsyncadd [#allocation6], 0
      %s44 = sshll.u32 %s2, 4
      %s45 = int_to_ptr.hbm [resolvable:$true] %s44
      %s46 = sshll.u32 [#allocation7], 4
      %s47 = int_to_ptr.vmem [resolvable:$true] %s46
      %52 = dma.hbm_to_vmem [thread:$0]  %s45, 2048, %s47, [#allocation6], 64, 64, 4
    $region13: #{tpu_custom_call.1} parent=1 // pred_fallthru
      _
    // Predicated region
    $region14: #{tpu_custom_call.1} parent=1 // pred_check
      _
    $region15: #{tpu_custom_call.1} parent=1 // pred_check_branch
      %54 = sbr.rel (0) target = $region17
    $region16: #{tpu_custom_call.1} parent=1 // pred_region
      %56 = vsyncadd [#allocation9], 0
      %s57 = sshll.u32 %s3, 4
      %s58 = int_to_ptr.hbm [resolvable:$true] %s57
      %s59 = sshll.u32 [#allocation8], 4
      %s60 = int_to_ptr.vmem [resolvable:$true] %s59
      %65 = dma.hbm_to_vmem [thread:$0]  %s58, 1024, %s60, [#allocation9], 64, 64, 4
    $region17: #{tpu_custom_call.1} parent=1 // pred_fallthru
      _
    // Predicated region
    $region18: #{tpu_custom_call.1} parent=1 // pred_check
      _
    $region19: #{tpu_custom_call.1} parent=1 // pred_check_branch
      %67 = sbr.rel (0) target = $region21
    $region20: #{tpu_custom_call.1} parent=1 // pred_region
      %69 = vsyncadd [#allocation9], 0
      %s70 = sshll.u32 %s4, 4
      %s71 = int_to_ptr.hbm [resolvable:$true] %s70
      %s72 = sshll.u32 [#allocation10], 4
      %s73 = int_to_ptr.vmem [resolvable:$true] %s72
      %78 = dma.hbm_to_vmem [thread:$0]  %s71, 1024, %s73, [#allocation9], 64, 64, 4
    $region21: #{tpu_custom_call.1} parent=1 // pred_fallthru
      _
    // Predicated region
    $region22: #{tpu_custom_call.1} parent=1 // pred_check
      _
    $region23: #{tpu_custom_call.1} parent=1 // pred_check_branch
      %80 = sbr.rel (0) target = $region25
    $region24: #{tpu_custom_call.1} parent=1 // pred_region
      %82 = vsyncadd [#allocation12], 0
      %s83 = sshll.u32 %s5, 4
      %s84 = int_to_ptr.hbm [resolvable:$true] %s83
      %s85 = sshll.u32 [#allocation11], 4
      %s86 = int_to_ptr.vmem [resolvable:$true] %s85
      %91 = dma.hbm_to_vmem [thread:$0]  %s84, 2048, %s86, [#allocation12], 128, 128, 8
    $region25: #{tpu_custom_call.1} parent=1 // pred_fallthru
      _
    // Predicated region
    $region26: #{tpu_custom_call.1} parent=1 // pred_check
      _
    $region27: #{tpu_custom_call.1} parent=1 // pred_check_branch
      %93 = sbr.rel (0) target = $region29
    $region28: #{tpu_custom_call.1} parent=1 // pred_region
      _
    $region29: #{tpu_custom_call.1} parent=1 // pred_fallthru
      _
    // Predicated region
    $region30: #{tpu_custom_call.1} parent=1 // pred_check
      _
    $region31: #{tpu_custom_call.1} parent=1 // pred_check_branch
      %95 = sbr.rel (0) target = $region33
    $region32: #{tpu_custom_call.1} parent=1 // pred_region
      _
    $region33: #{tpu_custom_call.1} parent=1 // pred_fallthru
      _
    // Predicated region
    $region34: #{tpu_custom_call.1} parent=1 // pred_check
      _
    $region35: #{tpu_custom_call.1} parent=1 // pred_check_branch
      %97 = sbr.rel (0) target = $region37
    $region36: #{tpu_custom_call.1} parent=1 // pred_region
      %99 = dma.done [#allocation3], 128
    $region37: #{tpu_custom_call.1} parent=1 // pred_fallthru
      _
    // Predicated region
    $region38: #{tpu_custom_call.1} parent=1 // pred_check
      _
    $region39: #{tpu_custom_call.1} parent=1 // pred_check_branch
      %101 = sbr.rel (0) target = $region41
    $region40: #{tpu_custom_call.1} parent=1 // pred_region
      %103 = dma.done [#allocation6], 64
    $region41: #{tpu_custom_call.1} parent=1 // pred_fallthru
      _
    // Predicated region
    $region42: #{tpu_custom_call.1} parent=1 // pred_check
      _
    $region43: #{tpu_custom_call.1} parent=1 // pred_check_branch
      %105 = sbr.rel (0) target = $region45
    $region44: #{tpu_custom_call.1} parent=1 // pred_region
      %107 = dma.done [#allocation6], 2048
    $region45: #{tpu_custom_call.1} parent=1 // pred_fallthru
      _
    // Predicated region
    $region46: #{tpu_custom_call.1} parent=1 // pred_check
      _
    $region47: #{tpu_custom_call.1} parent=1 // pred_check_branch
      %109 = sbr.rel (0) target = $region49
    $region48: #{tpu_custom_call.1} parent=1 // pred_region
      %111 = dma.done [#allocation9], 1024
    $region49: #{tpu_custom_call.1} parent=1 // pred_fallthru
      _
    // Predicated region
    $region50: #{tpu_custom_call.1} parent=1 // pred_check
      _
    $region51: #{tpu_custom_call.1} parent=1 // pred_check_branch
      %113 = sbr.rel (0) target = $region53
    $region52: #{tpu_custom_call.1} parent=1 // pred_region
      %115 = dma.done [#allocation9], 1024
    $region53: #{tpu_custom_call.1} parent=1 // pred_fallthru
      _
    // Predicated region
    $region54: #{tpu_custom_call.1} parent=1 // pred_check
      _
    $region55: #{tpu_custom_call.1} parent=1 // pred_check_branch
      %117 = sbr.rel (0) target = $region57
    $region56: #{tpu_custom_call.1} parent=1 // pred_region
      %119 = dma.done [#allocation12], 2048
    $region57: #{tpu_custom_call.1} parent=1 // pred_fallthru
      _
    %v120 = vld [vmem:[#allocation2] sm:$0xff]
    %v121 = vld [vmem:[#allocation5] sm:$0xf]
    %v122 = vld [vmem:[%s6] sm:$0x1]
    %v123 = vld [vmem:[%s6 + $0x1] sm:$0x1]
    %v124 = vld [vmem:[%s7] sm:$0x1]
    %v125 = vld [vmem:[%s7 + $0x1] sm:$0x1]
    %v126 = vld [vmem:[%s7 + $0x2] sm:$0x1]
    %v127 = vld [vmem:[#allocation7] sm:$0xf]
    %v128 = vld [vmem:[#allocation7 + $0x4] sm:$0xf]
    %v129 = vld [vmem:[#allocation7 + $0x8] sm:$0xf]
    %v130 = vld [vmem:[#allocation7 + $0xc] sm:$0xf]
    %v131 = vld [vmem:[#allocation7 + $0x10] sm:$0xf]
    %v132 = vld [vmem:[#allocation7 + $0x14] sm:$0xf]
    %v133 = vld [vmem:[#allocation7 + $0x18] sm:$0xf]
    %v134 = vld [vmem:[#allocation7 + $0x1c] sm:$0xf]
    %v135 = vld [vmem:[#allocation7 + $0x20] sm:$0xf]
    %v136 = vld [vmem:[#allocation7 + $0x24] sm:$0xf]
    %v137 = vld [vmem:[#allocation7 + $0x28] sm:$0xf]
    %v138 = vld [vmem:[#allocation7 + $0x2c] sm:$0xf]
    %v139 = vld [vmem:[#allocation7 + $0x30] sm:$0xf]
    %v140 = vld [vmem:[#allocation7 + $0x34] sm:$0xf]
    %v141 = vld [vmem:[#allocation7 + $0x38] sm:$0xf]
    %v142 = vld [vmem:[#allocation7 + $0x3c] sm:$0xf]
    %v143 = vld [vmem:[#allocation7 + $0x40] sm:$0xf]
    %v144 = vld [vmem:[#allocation7 + $0x44] sm:$0xf]
    %v145 = vld [vmem:[#allocation7 + $0x48] sm:$0xf]
    %v146 = vld [vmem:[#allocation7 + $0x4c] sm:$0xf]
    %v147 = vld [vmem:[#allocation7 + $0x50] sm:$0xf]
    %v148 = vld [vmem:[#allocation7 + $0x54] sm:$0xf]
    %v149 = vld [vmem:[#allocation7 + $0x58] sm:$0xf]
    %v150 = vld [vmem:[#allocation7 + $0x5c] sm:$0xf]
    %v151 = vld [vmem:[#allocation7 + $0x60] sm:$0xf]
    %v152 = vld [vmem:[#allocation7 + $0x64] sm:$0xf]
    %v153 = vld [vmem:[#allocation7 + $0x68] sm:$0xf]
    %v154 = vld [vmem:[#allocation7 + $0x6c] sm:$0xf]
    %v155 = vld [vmem:[#allocation7 + $0x70] sm:$0xf]
    %v156 = vld [vmem:[#allocation7 + $0x74] sm:$0xf]
    %v157 = vld [vmem:[#allocation7 + $0x78] sm:$0xf]
    %v158 = vld [vmem:[#allocation7 + $0x7c] sm:$0xf]
    %v159 = vld [vmem:[#allocation8] sm:$0xf]
    %v160 = vld [vmem:[#allocation8 + $0x4] sm:$0xf]
    %v161 = vld [vmem:[#allocation8 + $0x8] sm:$0xf]
    %v162 = vld [vmem:[#allocation8 + $0xc] sm:$0xf]
    %v163 = vld [vmem:[#allocation8 + $0x10] sm:$0xf]
    %v164 = vld [vmem:[#allocation8 + $0x14] sm:$0xf]
    %v165 = vld [vmem:[#allocation8 + $0x18] sm:$0xf]
    %v166 = vld [vmem:[#allocation8 + $0x1c] sm:$0xf]
    %v167 = vld [vmem:[#allocation8 + $0x20] sm:$0xf]
    %v168 = vld [vmem:[#allocation8 + $0x24] sm:$0xf]
    %v169 = vld [vmem:[#allocation8 + $0x28] sm:$0xf]
    %v170 = vld [vmem:[#allocation8 + $0x2c] sm:$0xf]
    %v171 = vld [vmem:[#allocation8 + $0x30] sm:$0xf]
    %v172 = vld [vmem:[#allocation8 + $0x34] sm:$0xf]
    %v173 = vld [vmem:[#allocation8 + $0x38] sm:$0xf]
    %v174 = vld [vmem:[#allocation8 + $0x3c] sm:$0xf]
    %v191 = vunpack.c.l.b16 %v159
    %v192 = vunpack.c.l.b16 %v160
    %v193 = vunpack.c.l.b16 %v161
    %v194 = vunpack.c.l.b16 %v162
    %v195 = vunpack.c.l.b16 %v163
    %v196 = vunpack.c.l.b16 %v164
    %v197 = vunpack.c.l.b16 %v165
    %v198 = vunpack.c.l.b16 %v166
    %v199 = vunpack.c.l.b16 %v167
    %v200 = vunpack.c.l.b16 %v168
    %v201 = vunpack.c.l.b16 %v169
    %v202 = vunpack.c.l.b16 %v170
    %v203 = vunpack.c.l.b16 %v171
    %v204 = vunpack.c.l.b16 %v172
    %v205 = vunpack.c.l.b16 %v173
    %v206 = vunpack.c.l.b16 %v174
    %v207 = vpack.c.b16 %v192, %v191
    %v208 = vpack.c.b16 %v194, %v193
    %v209 = vpack.c.b16 %v196, %v195
    %v210 = vpack.c.b16 %v198, %v197
    %v211 = vpack.c.b16 %v200, %v199
    %v212 = vpack.c.b16 %v202, %v201
    %v213 = vpack.c.b16 %v204, %v203
    %v214 = vpack.c.b16 %v206, %v205
    %223 = vmatpush.bf16.msra.mxu0 %v214
    %224 = vmatpush.bf16.msra.mxu0 %v213
    %225 = vmatpush.bf16.msra.mxu0 %v212
    %226 = vmatpush.bf16.msra.mxu0 %v211
    %227 = vmatpush.bf16.msra.mxu0 %v210
    %228 = vmatpush.bf16.msra.mxu0 %v209
    %229 = vmatpush.bf16.msra.mxu0 %v208
    %230 = vmatpush.bf16.msra.mxu0 %v207
    %231 = vmatmul.bf16.gmra.mxu0 %v121
    %v232 = vpop.f32.mrf.mxu0
    %v233 = vadd.f32 0.0, %v232
    %v234 = vpop.f32.mrf.mxu0
    %235 = vdwg.mxu0
    %v237 = vunpack.c.l.b16 %v120
    %v238 = vunpack.c.h.b16 %v120
    %v239 = vpack.c.b16 %v237, %v237
    %v240 = vpack.c.b16 %v238, %v238
    %v275 = vunpack.c.l.b16 %v127
    %v276 = vunpack.c.l.b16 %v128
    %v277 = vunpack.c.l.b16 %v129
    %v278 = vunpack.c.l.b16 %v130
    %v279 = vunpack.c.l.b16 %v131
    %v280 = vunpack.c.l.b16 %v132
    %v281 = vunpack.c.l.b16 %v133
    %v282 = vunpack.c.l.b16 %v134
    %v283 = vunpack.c.l.b16 %v135
    %v284 = vunpack.c.l.b16 %v136
    %v285 = vunpack.c.l.b16 %v137
    %v286 = vunpack.c.l.b16 %v138
    %v287 = vunpack.c.l.b16 %v139
    %v288 = vunpack.c.l.b16 %v140
    %v289 = vunpack.c.l.b16 %v141
    %v290 = vunpack.c.l.b16 %v142
    %v291 = vunpack.c.l.b16 %v143
    %v292 = vunpack.c.l.b16 %v144
    %v293 = vunpack.c.l.b16 %v145
    %v294 = vunpack.c.l.b16 %v146
    %v295 = vunpack.c.l.b16 %v147
    %v296 = vunpack.c.l.b16 %v148
    %v297 = vunpack.c.l.b16 %v149
    %v298 = vunpack.c.l.b16 %v150
    %v299 = vunpack.c.l.b16 %v151
    %v300 = vunpack.c.l.b16 %v152
    %v301 = vunpack.c.l.b16 %v153
    %v302 = vunpack.c.l.b16 %v154
    %v303 = vunpack.c.l.b16 %v155
    %v304 = vunpack.c.l.b16 %v156
    %v305 = vunpack.c.l.b16 %v157
    %v306 = vunpack.c.l.b16 %v158
    %v307 = vpack.c.b16 %v276, %v275
    %v308 = vpack.c.b16 %v278, %v277
    %v309 = vpack.c.b16 %v280, %v279
    %v310 = vpack.c.b16 %v282, %v281
    %v311 = vpack.c.b16 %v284, %v283
    %v312 = vpack.c.b16 %v286, %v285
    %v313 = vpack.c.b16 %v288, %v287
    %v314 = vpack.c.b16 %v290, %v289
    %v315 = vpack.c.b16 %v292, %v291
    %v316 = vpack.c.b16 %v294, %v293
    %v317 = vpack.c.b16 %v296, %v295
    %v318 = vpack.c.b16 %v298, %v297
    %v319 = vpack.c.b16 %v300, %v299
    %v320 = vpack.c.b16 %v302, %v301
    %v321 = vpack.c.b16 %v304, %v303
    %v322 = vpack.c.b16 %v306, %v305
    %339 = vmatpush.bf16.msra.mxu0 %v314
    %340 = vmatpush.bf16.msra.mxu0 %v313
    %341 = vmatpush.bf16.msra.mxu0 %v312
    %342 = vmatpush.bf16.msra.mxu0 %v311
    %343 = vmatpush.bf16.msra.mxu0 %v310
    %344 = vmatpush.bf16.msra.mxu0 %v309
    %345 = vmatpush.bf16.msra.mxu0 %v308
    %346 = vmatpush.bf16.msra.mxu0 %v307
    %347 = vmatmul.bf16.gmra.mxu0 %v239
    %v348 = vpop.f32.mrf.mxu0
    %v349 = vadd.f32 %v233, %v348
    %v350 = vpop.f32.mrf.mxu0
    %351 = vdwg.mxu0
    %352 = vmatpush.bf16.msra.mxu0 %v322
    %353 = vmatpush.bf16.msra.mxu0 %v321
    %354 = vmatpush.bf16.msra.mxu0 %v320
    %355 = vmatpush.bf16.msra.mxu0 %v319
    %356 = vmatpush.bf16.msra.mxu0 %v318
    %357 = vmatpush.bf16.msra.mxu0 %v317
    %358 = vmatpush.bf16.msra.mxu0 %v316
    %359 = vmatpush.bf16.msra.mxu0 %v315
    %360 = vmatmul.bf16.gmra.mxu0 %v240
    %v361 = vpop.f32.mrf.mxu0
    %v362 = vadd.f32 %v349, %v361
    %v363 = vpop.f32.mrf.mxu0
    %364 = vdwg.mxu0
    %v365 = vperm.slane %v122, 0
    %v366 = vadd.f32 %v362, %v365
    %vm367 = vcmp.gt.f32.partialorder %v366, 0.0
    %v368 = vmul.f32 %v366, 0.01
    %v369 = vsel %vm367, %v366, %v368
    %v370 = vpack.c.bf16 %v369, %v369
    %v371 = vld [vmem:[#allocation10] sm:$0xf]
    %v372 = vld [vmem:[#allocation10 + $0x4] sm:$0xf]
    %v373 = vld [vmem:[#allocation10 + $0x8] sm:$0xf]
    %v374 = vld [vmem:[#allocation10 + $0xc] sm:$0xf]
    %v375 = vld [vmem:[#allocation10 + $0x10] sm:$0xf]
    %v376 = vld [vmem:[#allocation10 + $0x14] sm:$0xf]
    %v377 = vld [vmem:[#allocation10 + $0x18] sm:$0xf]
    %v378 = vld [vmem:[#allocation10 + $0x1c] sm:$0xf]
    %v379 = vld [vmem:[#allocation10 + $0x20] sm:$0xf]
    %v380 = vld [vmem:[#allocation10 + $0x24] sm:$0xf]
    %v381 = vld [vmem:[#allocation10 + $0x28] sm:$0xf]
    %v382 = vld [vmem:[#allocation10 + $0x2c] sm:$0xf]
    %v383 = vld [vmem:[#allocation10 + $0x30] sm:$0xf]
    %v384 = vld [vmem:[#allocation10 + $0x34] sm:$0xf]
    %v385 = vld [vmem:[#allocation10 + $0x38] sm:$0xf]
    %v386 = vld [vmem:[#allocation10 + $0x3c] sm:$0xf]
    %v387 = vperm.slane %v123, 0
    %v404 = vunpack.c.l.b16 %v371
    %v405 = vunpack.c.l.b16 %v372
    %v406 = vunpack.c.l.b16 %v373
    %v407 = vunpack.c.l.b16 %v374
    %v408 = vunpack.c.l.b16 %v375
    %v409 = vunpack.c.l.b16 %v376
    %v410 = vunpack.c.l.b16 %v377
    %v411 = vunpack.c.l.b16 %v378
    %v412 = vunpack.c.l.b16 %v379
    %v413 = vunpack.c.l.b16 %v380
    %v414 = vunpack.c.l.b16 %v381
    %v415 = vunpack.c.l.b16 %v382
    %v416 = vunpack.c.l.b16 %v383
    %v417 = vunpack.c.l.b16 %v384
    %v418 = vunpack.c.l.b16 %v385
    %v419 = vunpack.c.l.b16 %v386
    %v420 = vpack.c.b16 %v405, %v404
    %v421 = vpack.c.b16 %v407, %v406
    %v422 = vpack.c.b16 %v409, %v408
    %v423 = vpack.c.b16 %v411, %v410
    %v424 = vpack.c.b16 %v413, %v412
    %v425 = vpack.c.b16 %v415, %v414
    %v426 = vpack.c.b16 %v417, %v416
    %v427 = vpack.c.b16 %v419, %v418
    %436 = vmatpush.bf16.msra.mxu0 %v427
    %437 = vmatpush.bf16.msra.mxu0 %v426
    %438 = vmatpush.bf16.msra.mxu0 %v425
    %439 = vmatpush.bf16.msra.mxu0 %v424
    %440 = vmatpush.bf16.msra.mxu0 %v423
    %441 = vmatpush.bf16.msra.mxu0 %v422
    %442 = vmatpush.bf16.msra.mxu0 %v421
    %443 = vmatpush.bf16.msra.mxu0 %v420
    %444 = vmatmul.bf16.gmra.mxu0 %v370
    %v445 = vpop.f32.mrf.mxu0
    %v446 = vadd.f32 %v387, %v445
    %v447 = vpop.f32.mrf.mxu0
    %448 = vdwg.mxu0
    %vm449 = vcmp.gt.f32.partialorder %v446, 0.0
    %v450 = vmul.f32 %v446, 0.01
    %v451 = vsel %vm449, %v446, %v450
    %v452 = vld [vmem:[#allocation11] sm:$0xff]
    %v453 = vld [vmem:[#allocation11 + $0x8] sm:$0xff]
    %v454 = vld [vmem:[#allocation11 + $0x10] sm:$0xff]
    %v455 = vld [vmem:[#allocation11 + $0x18] sm:$0xff]
    %v456 = vld [vmem:[#allocation11 + $0x20] sm:$0xff]
    %v457 = vld [vmem:[#allocation11 + $0x28] sm:$0xff]
    %v458 = vld [vmem:[#allocation11 + $0x30] sm:$0xff]
    %v459 = vld [vmem:[#allocation11 + $0x38] sm:$0xff]
    %v460 = vld [vmem:[#allocation11 + $0x40] sm:$0xff]
    %v461 = vld [vmem:[#allocation11 + $0x48] sm:$0xff]
    %v462 = vld [vmem:[#allocation11 + $0x50] sm:$0xff]
    %v463 = vld [vmem:[#allocation11 + $0x58] sm:$0xff]
    %v464 = vld [vmem:[#allocation11 + $0x60] sm:$0xff]
    %v465 = vld [vmem:[#allocation11 + $0x68] sm:$0xff]
    %v466 = vld [vmem:[#allocation11 + $0x70] sm:$0xff]
    %v467 = vld [vmem:[#allocation11 + $0x78] sm:$0xff]
    %v468 = vperm.slane %v124, 0
    %469 = vmatpush.msra.mxu0 %v467
    %470 = vmatpush.msra.mxu0 %v466
    %471 = vmatpush.msra.mxu0 %v465
    %472 = vmatpush.msra.mxu0 %v464
    %473 = vmatpush.msra.mxu0 %v463
    %474 = vmatpush.msra.mxu0 %v462
    %475 = vmatpush.msra.mxu0 %v461
    %476 = vmatpush.msra.mxu0 %v460
    %477 = vmatpush.msra.mxu0 %v459
    %478 = vmatpush.msra.mxu0 %v458
    %479 = vmatpush.msra.mxu0 %v457
    %480 = vmatpush.msra.mxu0 %v456
    %481 = vmatpush.msra.mxu0 %v455
    %482 = vmatpush.msra.mxu0 %v454
    %483 = vmatpush.msra.mxu0 %v453
    %484 = vmatpush.msra.mxu0 %v452
    %485 = vmatmul.f32.gmra.mxu0 %v451
    %v486 = vpop.f32.mrf.mxu0
    %v487 = vadd.f32 %v468, %v486
    %488 = vdwg.mxu0
    %v489 = vlaneseq
    %v490 = vand.u32 %v489, 127
    %v491 = vmax.f32 %v487, 0.0
    %vm492 = vcmp.ne.f32.partialorder %v487, %v487
    %v493 = vadd.f32 %v487, 0.0
    %v494 = vand.u32 2147483647, %v487
    %v495 = vsub.f32 0.0, %v494
    %v496 = vmul.f32 %v495, 1.442695
    %v497 = vpow.pop %v496
    %v498 = vadd.f32 %v497, 1.0
    %v499 = vlog2.pop %v498
    %v500 = vmul.f32 %v499, 0.6931472
    %v501 = vmul.f32 -0.5, %v497
    %v502 = vadd.f32 %v501, 1.0
    %v503 = vmul.f32 %v502, %v497
    %v504 = vand.u32 2147483647, %v497
    %vm505 = vcmp.lt.f32.partialorder %v504, 0.0004427343
    %v506 = vsel %vm505, %v503, %v500
    %v507 = vadd.f32 %v491, %v506
    %v508 = vsel %vm492, %v493, %v507
    %v509 = vadd.f32 %v508, 1e-05
    %v510 = vxor.u32 %v487, 2147483648
    %v511 = vmul.f32 %v510, 1.442695
    %v512 = vpow.pop %v511
    %v513 = vadd.f32 %v512, 1.0
    %v514 = vrcp.pop %v513
    %v515 = vmul.f32 %v513, %v514
    %v516 = vsub.f32 1.0, %v515
    %v517 = vmul.f32 %v514, %v516
    %v518 = vadd.f32 %v514, %v517
    %vm519 = vweird.f32 %v513
    %vm520 = vweird.f32 %v514
    %vm521 = vmor %vm519, %vm520
    %v522 = vsel %vm521, %v514, %v518
    %v523 = vand.u32 2147483647, %v513
    %vm524 = vcmp.eq.f32.partialorder %v523, 8.507059e+37
    %v525 = vand.u32 %v513, 2147483648
    %v526 = vor.u32 1.1754944e-38, %v525
    %v527 = vsel %vm524, %v526, %v522
    %v528 = vmul.f32 1.0, %v527
    %v529 = vperm.slane %v126, 0
    %v530 = vmul.f32 %v529, %v528
    %v531 = vperm.slane %v125, 0
    %v532 = vadd.f32 %v531, %v530
    %vm533 = vcmp.lt.s32.totalorder %v490, 4
    %vm534 = vcmp.lt.s32.totalorder %v490, 8
    %v535 = vsel %vm534, %v509, %v532
    %v536 = vsel %vm533, %v487, %v535
    %537 = vst [vmem:[#allocation13] sm:$0xff] %v536
    // Predicated region
    $region58: #{tpu_custom_call.1} parent=1 // pred_check
      _
    $region59: #{tpu_custom_call.1} parent=1 // pred_check_branch
      %539 = sbr.rel (0) target = $region61
    $region60: #{tpu_custom_call.1} parent=1 // pred_region
      %541 = vsyncadd [#allocation4], 0
      %s543 = sshll.u32 [#allocation13], 4
      %s544 = int_to_ptr.vmem [resolvable:$true] %s543
      %s545 = sshll.u32 %s8, 4
      %s546 = int_to_ptr.hbm [resolvable:$true] %s545
      %548 = dma.vmem_to_hbm [thread:$0]  %s544, 128, %s546, [#allocation4]
    $region61: #{tpu_custom_call.1} parent=1 // pred_fallthru
      _
    // Predicated region
    $region62: #{tpu_custom_call.1} parent=1 // pred_check
      _
    $region63: #{tpu_custom_call.1} parent=1 // pred_check_branch
      %550 = sbr.rel (0) target = $region65
    $region64: #{tpu_custom_call.1} parent=1 // pred_region
      %552 = dma.done [#allocation4], 128
    $region65: #{tpu_custom_call.1} parent=1 // pred_fallthru
      _
    %553 = vsyncpa [#allocation3], 1
    %554 = vsyncpa [#allocation6], 1
    %555 = vsyncpa [#allocation9], 1
    %556 = vsyncpa [#allocation12], 1
    %557 = vsyncpa [#allocation4], 1

</llo_original>
